<compile_context>
chip_gen: v6e
topology: v6e:2x2x1
jax: 0.10.0
libtpu: 0.0.40
codegen_flags: <defaults>
</compile_context>

<pallas_src>
import functools
import math

import jax
import jax.numpy as jnp
from jax.experimental import pallas as pl
from jax.experimental.pallas import tpu as pltpu

# Module-fixed hidden sizes (from the PyTorch spec).
H1_STATE = 256                   # state_fc1 out
H_FEAT = 128                     # state_fc2 / action_fc1 / joint_fc1 out
H_J2 = 64                        # joint_fc2 out
FUSED_OUT = H1_STATE + H_FEAT    # 384 = [state_fc1 | action_fc1] fused out dim
W_REST_ROWS = 640                # packed downstream weight rows
SUBLANES = 8                     # bias / joint_fc3 tail rows appended to w_in
M_TILE = 128                     # batch rows per grid step (256 also fine on v6e/v7x)


def _multi_critic_kernel(x_ref, w_in_ref, w_rest_ref, q_ref, *, xdim):
    """One batch tile of the full forward pass.

    x_ref     : (M_TILE, xdim) bf16   [state_input | action_input | zero pad]
    w_in_ref  : (xdim+8, 384)  bf16   rows 0:xdim  block-diag [state_fc1^T ; action_fc1^T]
                                      row xdim+0   [b_state1(256) | b_action1(128)]
                                      row xdim+1   b_state2   (lanes 0:128)
                                      row xdim+2   b_joint1   (lanes 0:128)
                                      row xdim+3   b_joint2   (lanes 0:64)
                                      row xdim+4   joint_fc3 weight (lanes 0:64)
                                      row xdim+5   b_joint3   (lane 0)
    w_rest_ref: (640, 128)     bf16   rows 0:256   state_fc2^T
                                      rows 256:384 joint_fc1^T[:128]  (state half)
                                      rows 384:512 joint_fc1^T[128:]  (action half)
                                      rows 512:640 joint_fc2^T (cols 64:128 zero)
    q_ref     : (M_TILE, 128)  f32    q value broadcast over lanes; col 0 is read back
    """
    f32 = jnp.float32
    bf16 = jnp.bfloat16

    x = x_ref[...]                                           # (M, xdim) bf16
    w_in = w_in_ref[0:xdim, :]                               # (xdim, 384) bf16
    tail = w_in_ref[xdim:xdim + SUBLANES, :].astype(f32)     # (8, 384) biases / wj3

    b_fused = tail[0:1, :]                  # [b_state1 | b_action1]
    b_state2 = tail[1:2, 0:H_FEAT]
    b_joint1 = tail[2:3, 0:H_FEAT]
    b_joint2 = tail[3:4, 0:H_FEAT]          # lanes 64:128 are zero padding
    wj3_row = tail[4:5, 0:H_FEAT]           # joint_fc3 weight; lanes 64:128 zero
    b_joint3 = tail[5:6, 0:1]               # scalar bias

    # Fused first layer: [state_fc1 | action_fc1] in one block-diagonal matmul.
    h1 = jnp.dot(x, w_in, preferred_element_type=f32) + b_fused
    h1 = jnp.maximum(h1, 0.0)
    # TODO(synk): F.dropout(p=0.2) after state_fc1 / action_fc1 / joint_fc1 in
    # the reference is training-mode only; implemented as eval-mode identity.
    state_x = h1[:, :H1_STATE].astype(bf16)                  # (M, 256)
    action_feat = h1[:, H1_STATE:FUSED_OUT].astype(bf16)     # (M, 128)

    # state_features = relu(state_x @ W2 + b2)
    state_feat = jnp.maximum(
        jnp.dot(state_x, w_rest_ref[0:256, :], preferred_element_type=f32)
        + b_state2, 0.0)

    # joint_fc1 on concat([state_features, action_features]) via split weight.
    j1 = jnp.maximum(
        jnp.dot(state_feat.astype(bf16), w_rest_ref[256:384, :],
                preferred_element_type=f32)
        + jnp.dot(action_feat, w_rest_ref[384:512, :],
                  preferred_element_type=f32)
        + b_joint1, 0.0)

    # joint_fc2 (output zero-padded 64 -> 128 lanes).
    j2 = jnp.maximum(
        jnp.dot(j1.astype(bf16), w_rest_ref[512:640, :],
                preferred_element_type=f32)
        + b_joint2, 0.0)

    # joint_fc3 as VPU multiply + lane reduction (no MXU push for 1 output).
    q = jnp.sum(j2 * wj3_row, axis=-1, keepdims=True) + b_joint3     # (M, 1)

    # Lane-dense unmasked store: q broadcast across all 128 lanes.
    q_ref[...] = jnp.broadcast_to(q, q_ref.shape)


def _xavier_uniform(key, in_dim, out_dim):
    # torch.nn.init.xavier_uniform_ (gain=1); bound symmetric in fan_in/fan_out
    # so the transposed (in, out) storage uses the same bound.
    bound = math.sqrt(6.0 / (in_dim + out_dim))
    return jax.random.uniform(key, (in_dim, out_dim), jnp.float32, -bound, bound)


def init_params(key, device_num, neighbors_num, bias_scale=0.0):
    """Initialize Multi_Critic weights and pack them into two bf16 kernel slabs.

    bias_scale=0.0 matches the PyTorch _init_weights (zero biases); a nonzero
    value produces small random biases to exercise the bias-packing layout.
    """
    state_dim = (device_num * device_num          # dynamic_re
                 + device_num                     # static_re
                 + device_num                     # task_em
                 + device_num * neighbors_num     # neighbor_matrix
                 + device_num                     # r_mask
                 + 32)                            # reputation_aware
    action_dim = device_num * (neighbors_num + 2) + device_num * 2
    xdim = ((state_dim + action_dim + 127) // 128) * 128   # lane-pad input width

    kw = jax.random.split(key, 12)
    w_state1 = _xavier_uniform(kw[0], state_dim, H1_STATE)
    w_state2 = _xavier_uniform(kw[1], H1_STATE, H_FEAT)
    w_action1 = _xavier_uniform(kw[2], action_dim, H_FEAT)
    w_joint1 = _xavier_uniform(kw[3], 2 * H_FEAT, H_FEAT)
    w_joint2 = _xavier_uniform(kw[4], H_FEAT, H_J2)
    w_joint3 = _xavier_uniform(kw[5], H_J2, 1)

    def bias(k, n):
        if bias_scale == 0.0:
            return jnp.zeros((n,), jnp.float32)
        return bias_scale * jax.random.normal(k, (n,), jnp.float32)

    b_state1 = bias(kw[6], H1_STATE)
    b_state2 = bias(kw[7], H_FEAT)
    b_action1 = bias(kw[8], H_FEAT)
    b_joint1 = bias(kw[9], H_FEAT)
    b_joint2 = bias(kw[10], H_J2)
    b_joint3 = bias(kw[11], 1)

    # Fused block-diagonal first-layer weight + bias / joint_fc3 tail rows.
    w_in = jnp.zeros((xdim + SUBLANES, FUSED_OUT), jnp.float32)
    w_in = w_in.at[:state_dim, :H1_STATE].set(w_state1)
    w_in = w_in.at[state_dim:state_dim + action_dim, H1_STATE:].set(w_action1)
    w_in = w_in.at[xdim + 0, :H1_STATE].set(b_state1)
    w_in = w_in.at[xdim + 0, H1_STATE:].set(b_action1)
    w_in = w_in.at[xdim + 1, :H_FEAT].set(b_state2)
    w_in = w_in.at[xdim + 2, :H_FEAT].set(b_joint1)
    w_in = w_in.at[xdim + 3, :H_J2].set(b_joint2)
    w_in = w_in.at[xdim + 4, :H_J2].set(w_joint3[:, 0])
    w_in = w_in.at[xdim + 5, 0].set(b_joint3[0])

    # Packed downstream weights, all 128 lanes wide, sublane-aligned offsets.
    w_rest = jnp.zeros((W_REST_ROWS, H_FEAT), jnp.float32)
    w_rest = w_rest.at[0:256, :].set(w_state2)
    w_rest = w_rest.at[256:384, :].set(w_joint1[:H_FEAT])
    w_rest = w_rest.at[384:512, :].set(w_joint1[H_FEAT:])
    w_rest = w_rest.at[512:640, :H_J2].set(w_joint2)

    return {
        "w_in": w_in.astype(jnp.bfloat16),
        "w_rest": w_rest.astype(jnp.bfloat16),
        "xdim": xdim, "state_dim": state_dim, "action_dim": action_dim,
        # Unpacked f32 copies kept only for the pure-JAX reference checks.
        "_raw": (w_state1, b_state1, w_state2, b_state2, w_action1, b_action1,
                 w_joint1, b_joint1, w_joint2, b_joint2, w_joint3, b_joint3),
    }


def multi_critic_forward_batch(params, dynamic_re, static_re, task_em,
                               neighbor_matrix, r_mask, reputation_aware,
                               offload_action, server_action):
    """Batched forward: every input has a leading batch dim B. Returns (B, 1)."""
    f32 = jnp.float32
    B = jnp.asarray(dynamic_re).shape[0]

    def flat(a):
        return jnp.asarray(a, f32).reshape(B, -1)

    x = jnp.concatenate([
        flat(dynamic_re), flat(static_re), flat(task_em),
        flat(neighbor_matrix), flat(r_mask), flat(reputation_aware),
        flat(offload_action), flat(server_action)], axis=1)

    xdim = params["xdim"]
    b_pad = ((B + M_TILE - 1) // M_TILE) * M_TILE
    x_p = jnp.zeros((b_pad, xdim), jnp.bfloat16)
    x_p = x_p.at[:B, :x.shape[1]].set(x.astype(jnp.bfloat16))

    kernel = functools.partial(_multi_critic_kernel, xdim=xdim)

    q_slab = pl.pallas_call(
        kernel,
        out_shape=jax.ShapeDtypeStruct((b_pad, H_FEAT), f32),
        grid_spec=pltpu.PrefetchScalarGridSpec(
            num_scalar_prefetch=0,
            grid=(b_pad // M_TILE,),
            in_specs=[
                pl.BlockSpec((M_TILE, xdim), lambda i: (i, 0)),
                # Constant block index -> weights DMA'd once, VMEM-resident.
                pl.BlockSpec((xdim + SUBLANES, FUSED_OUT), lambda i: (0, 0)),
                pl.BlockSpec((W_REST_ROWS, H_FEAT), lambda i: (0, 0)),
            ],
            out_specs=pl.BlockSpec((M_TILE, H_FEAT), lambda i: (i, 0)),
        ),
        compiler_params=pltpu.CompilerParams(
            dimension_semantics=("parallel",)),
    )(x_p, params["w_in"], params["w_rest"])

    return q_slab[:B, 0:1]   # (B, 1)


def multi_critic_forward(params, dynamic_re, static_re, task_em,
                         neighbor_matrix, r_mask, reputation_aware,
                         offload_action, server_action):
    """Single-sample forward matching the PyTorch module. Returns shape (1,)."""
    q = multi_critic_forward_batch(
        params,
        *(jnp.asarray(a, jnp.float32)[None] for a in (
            dynamic_re, static_re, task_em, neighbor_matrix, r_mask,
            reputation_aware, offload_action, server_action)))
    return q[0]   # (1,)


def _reference_forward(raw, state_input, action_input, *, emulate_bf16):
    """Pure-JAX reference (eval-mode dropout). emulate_bf16 mimics the kernel's
    bf16 weight/activation rounding with f32 accumulation."""
    (w_s1, b_s1, w_s2, b_s2, w_a1, b_a1,
     w_j1, b_j1, w_j2, b_j2, w_j3, b_j3) = raw
    f32 = jnp.float32
    if emulate_bf16:
        r = lambda a: jnp.asarray(a, f32).astype(jnp.bfloat16).astype(f32)
    else:
        r = lambda a: jnp.asarray(a, f32)
    dot = lambda a, b: jnp.dot(a, b, precision=jax.lax.Precision.HIGHEST)

    state_x = jax.nn.relu(dot(r(state_input), r(w_s1)) + r(b_s1))
    state_features = jax.nn.relu(dot(r(state_x), r(w_s2)) + r(b_s2))
    action_features = jax.nn.relu(dot(r(action_input), r(w_a1)) + r(b_a1))
    combined = jnp.concatenate([state_features, action_features], axis=-1)
    x = jax.nn.relu(dot(r(combined), r(w_j1)) + r(b_j1))
    x = jax.nn.relu(dot(r(x), r(w_j2)) + r(b_j2))
    return dot(x, r(w_j3)) + r(b_j3)     # final layer runs in f32 in the kernel


if __name__ == "__main__":
    device_num = 8
    neighbors_num = 3
    B = 4

    key = jax.random.PRNGKey(0)
    k_param, k_param_b, k_in = jax.random.split(key, 3)
    params = init_params(k_param, device_num, neighbors_num)

    kin = jax.random.split(k_in, 8)
    dynamic_re = jax.random.uniform(kin[0], (B, device_num, device_num), jnp.float32)
    static_re = jax.random.uniform(kin[1], (B, device_num), jnp.float32)
    task_em = jax.random.uniform(kin[2], (B, device_num), jnp.float32)
    neighbor_matrix = jax.random.uniform(kin[3], (B, device_num, neighbors_num), jnp.float32)
    r_mask = jax.random.uniform(kin[4], (B, device_num), jnp.float32)
    reputation_aware = jax.random.normal(kin[5], (B, 32), jnp.float32)
    offload_action = jax.random.uniform(kin[6], (B, device_num, neighbors_num + 2), jnp.float32)
    server_action = jax.random.uniform(kin[7], (B, device_num, 2), jnp.float32)

    # Batched kernel forward.
    q_batch = jax.block_until_ready(multi_critic_forward_batch(
        params, dynamic_re, static_re, task_em, neighbor_matrix, r_mask,
        reputation_aware, offload_action, server_action))
    assert q_batch.shape == (B, 1)

    # Flattened inputs for the pure-JAX references.
    state_in = jnp.concatenate([
        dynamic_re.reshape(B, -1), static_re, task_em,
        neighbor_matrix.reshape(B, -1), r_mask, reputation_aware], axis=1)
    action_in = jnp.concatenate([
        offload_action.reshape(B, -1), server_action.reshape(B, -1)], axis=1)

    # 1) Tight check vs a bf16-consistent reference (same rounding, f32 accum).
    q_bf16_ref = _reference_forward(params["_raw"], state_in, action_in,
                                    emulate_bf16=True)
    assert jnp.allclose(q_batch, q_bf16_ref, rtol=1e-2, atol=1e-2), (q_batch, q_bf16_ref)

    # 2) Loose check vs the full-f32 module semantics (bf16 weight drift only).
    q_f32_ref = _reference_forward(params["_raw"], state_in, action_in,
                                   emulate_bf16=False)
    assert jnp.allclose(q_batch, q_f32_ref, rtol=1e-1, atol=1e-1), (q_batch, q_f32_ref)

    # 3) Single-sample wrapper (PyTorch-module call shape) agrees with batched.
    q_single = jax.block_until_ready(multi_critic_forward(
        params, dynamic_re[0], static_re[0], task_em[0], neighbor_matrix[0],
        r_mask[0], reputation_aware[0], offload_action[0], server_action[0]))
    assert q_single.shape == (1,)
    assert jnp.allclose(q_single, q_batch[0], rtol=1e-5, atol=1e-5)

    # 4) Nonzero-bias packing check (exercises the bias/joint_fc3 tail layout).
    params_b = init_params(k_param_b, device_num, neighbors_num, bias_scale=0.1)
    q_b = jax.block_until_ready(multi_critic_forward_batch(
        params_b, dynamic_re, static_re, task_em, neighbor_matrix, r_mask,
        reputation_aware, offload_action, server_action))
    q_b_ref = _reference_forward(params_b["_raw"], state_in, action_in,
                                 emulate_bf16=True)
    assert jnp.allclose(q_b, q_b_ref, rtol=1e-2, atol=1e-2), (q_b, q_b_ref)

    print("KERNEL_OK")
</pallas_src>

<mosaic_0001>
module attributes {stable_mosaic.version = 11 : i64} {
  func.func @_multi_critic_kernel(%arg0: i32, %arg1: memref<128x256xbf16, #tpu.memory_space<vmem>>, %arg2: memref<264x384xbf16, #tpu.memory_space<vmem>>, %arg3: memref<640x128xbf16, #tpu.memory_space<vmem>>, %arg4: memref<128x128xf32, #tpu.memory_space<vmem>>) attributes {dimension_semantics = [#tpu.dimension_semantics<parallel>], iteration_bounds = array<i64: 1>, scalar_prefetch = 0 : i64, scratch_operands = 0 : i64, tpu.core_type = #tpu.core_type<tc>, window_params = [{transform_indices = @transform_0, window_bounds = array<i64: 128, 256>}, {pipeline_mode = #tpu.pipeline_mode<synchronous>, transform_indices = @transform_1, window_bounds = array<i64: 264, 384>}, {pipeline_mode = #tpu.pipeline_mode<synchronous>, transform_indices = @transform_2, window_bounds = array<i64: 640, 128>}, {transform_indices = @transform_3, window_bounds = array<i64: 128, 128>}]} {
    %c0 = arith.constant 0 : index
    %c0_0 = arith.constant 0 : index
    %0 = vector.load %arg1[%c0, %c0_0] : memref<128x256xbf16, #tpu.memory_space<vmem>>, vector<128x256xbf16>
    %c0_1 = arith.constant 0 : index
    %c0_2 = arith.constant 0 : index
    %1 = vector.load %arg2[%c0_1, %c0_2] : memref<264x384xbf16, #tpu.memory_space<vmem>>, vector<256x384xbf16>
    %c256 = arith.constant 256 : index
    %c0_3 = arith.constant 0 : index
    %2 = vector.load %arg2[%c256, %c0_3] : memref<264x384xbf16, #tpu.memory_space<vmem>>, vector<8x384xbf16>
    %3 = arith.extf %2 : vector<8x384xbf16> to vector<8x384xf32>
    %4 = vector.extract_strided_slice %3 {offsets = [0, 0], sizes = [1, 384], strides = [1, 1]} : vector<8x384xf32> to vector<1x384xf32>
    %5 = vector.extract_strided_slice %3 {offsets = [1, 0], sizes = [1, 128], strides = [1, 1]} : vector<8x384xf32> to vector<1x128xf32>
    %6 = vector.extract_strided_slice %3 {offsets = [2, 0], sizes = [1, 128], strides = [1, 1]} : vector<8x384xf32> to vector<1x128xf32>
    %7 = vector.extract_strided_slice %3 {offsets = [3, 0], sizes = [1, 128], strides = [1, 1]} : vector<8x384xf32> to vector<1x128xf32>
    %8 = vector.extract_strided_slice %3 {offsets = [4, 0], sizes = [1, 128], strides = [1, 1]} : vector<8x384xf32> to vector<1x128xf32>
    %9 = vector.extract_strided_slice %3 {offsets = [5, 0], sizes = [1, 1], strides = [1, 1]} : vector<8x384xf32> to vector<1x1xf32>
    %cst = arith.constant dense<0.000000e+00> : vector<128x384xf32>
    %10 = tpu.matmul %0, %1, %cst {dimension_numbers = #tpu.dot_dimension_numbers<[1], [0], [0], [1], [0, 0, 1, 1], [], []>} : vector<128x256xbf16>, vector<256x384xbf16>, vector<128x384xf32> -> vector<128x384xf32>
    %11 = vector.broadcast %4 : vector<1x384xf32> to vector<128x384xf32>
    %12 = arith.addf %10, %11 : vector<128x384xf32>
    %cst_4 = arith.constant 0.000000e+00 : f32
    %13 = vector.broadcast %cst_4 : f32 to vector<128x384xf32>
    %14 = arith.maximumf %12, %13 : vector<128x384xf32>
    %15 = vector.extract_strided_slice %14 {offsets = [0, 0], sizes = [128, 256], strides = [1, 1]} : vector<128x384xf32> to vector<128x256xf32>
    %16 = arith.truncf %15 : vector<128x256xf32> to vector<128x256xbf16>
    %17 = vector.extract_strided_slice %14 {offsets = [0, 256], sizes = [128, 128], strides = [1, 1]} : vector<128x384xf32> to vector<128x128xf32>
    %18 = arith.truncf %17 : vector<128x128xf32> to vector<128x128xbf16>
    %c0_5 = arith.constant 0 : index
    %c0_6 = arith.constant 0 : index
    %19 = vector.load %arg3[%c0_5, %c0_6] : memref<640x128xbf16, #tpu.memory_space<vmem>>, vector<256x128xbf16>
    %cst_7 = arith.constant dense<0.000000e+00> : vector<128x128xf32>
    %20 = tpu.matmul %16, %19, %cst_7 {dimension_numbers = #tpu.dot_dimension_numbers<[1], [0], [0], [1], [0, 0, 1, 1], [], []>} : vector<128x256xbf16>, vector<256x128xbf16>, vector<128x128xf32> -> vector<128x128xf32>
    %21 = vector.broadcast %5 : vector<1x128xf32> to vector<128x128xf32>
    %22 = arith.addf %20, %21 : vector<128x128xf32>
    %cst_8 = arith.constant 0.000000e+00 : f32
    %23 = vector.broadcast %cst_8 : f32 to vector<128x128xf32>
    %24 = arith.maximumf %22, %23 : vector<128x128xf32>
    %25 = arith.truncf %24 : vector<128x128xf32> to vector<128x128xbf16>
    %c256_9 = arith.constant 256 : index
    %c0_10 = arith.constant 0 : index
    %26 = vector.load %arg3[%c256_9, %c0_10] : memref<640x128xbf16, #tpu.memory_space<vmem>>, vector<128x128xbf16>
    %cst_11 = arith.constant dense<0.000000e+00> : vector<128x128xf32>
    %27 = tpu.matmul %25, %26, %cst_11 {dimension_numbers = #tpu.dot_dimension_numbers<[1], [0], [0], [1], [0, 0, 1, 1], [], []>} : vector<128x128xbf16>, vector<128x128xbf16>, vector<128x128xf32> -> vector<128x128xf32>
    %c384 = arith.constant 384 : index
    %c0_12 = arith.constant 0 : index
    %28 = vector.load %arg3[%c384, %c0_12] : memref<640x128xbf16, #tpu.memory_space<vmem>>, vector<128x128xbf16>
    %cst_13 = arith.constant dense<0.000000e+00> : vector<128x128xf32>
    %29 = tpu.matmul %18, %28, %cst_13 {dimension_numbers = #tpu.dot_dimension_numbers<[1], [0], [0], [1], [0, 0, 1, 1], [], []>} : vector<128x128xbf16>, vector<128x128xbf16>, vector<128x128xf32> -> vector<128x128xf32>
    %30 = arith.addf %27, %29 : vector<128x128xf32>
    %31 = vector.broadcast %6 : vector<1x128xf32> to vector<128x128xf32>
    %32 = arith.addf %30, %31 : vector<128x128xf32>
    %cst_14 = arith.constant 0.000000e+00 : f32
    %33 = vector.broadcast %cst_14 : f32 to vector<128x128xf32>
    %34 = arith.maximumf %32, %33 : vector<128x128xf32>
    %35 = arith.truncf %34 : vector<128x128xf32> to vector<128x128xbf16>
    %c512 = arith.constant 512 : index
    %c0_15 = arith.constant 0 : index
    %36 = vector.load %arg3[%c512, %c0_15] : memref<640x128xbf16, #tpu.memory_space<vmem>>, vector<128x128xbf16>
    %cst_16 = arith.constant dense<0.000000e+00> : vector<128x128xf32>
    %37 = tpu.matmul %35, %36, %cst_16 {dimension_numbers = #tpu.dot_dimension_numbers<[1], [0], [0], [1], [0, 0, 1, 1], [], []>} : vector<128x128xbf16>, vector<128x128xbf16>, vector<128x128xf32> -> vector<128x128xf32>
    %38 = vector.broadcast %7 : vector<1x128xf32> to vector<128x128xf32>
    %39 = arith.addf %37, %38 : vector<128x128xf32>
    %cst_17 = arith.constant 0.000000e+00 : f32
    %40 = vector.broadcast %cst_17 : f32 to vector<128x128xf32>
    %41 = arith.maximumf %39, %40 : vector<128x128xf32>
    %42 = vector.broadcast %8 : vector<1x128xf32> to vector<128x128xf32>
    %43 = arith.mulf %41, %42 : vector<128x128xf32>
    %cst_18 = arith.constant dense<0.000000e+00> : vector<128xf32>
    %44 = vector.multi_reduction <add>, %43, %cst_18 [1] : vector<128x128xf32> to vector<128xf32>
    %45 = vector.shape_cast %44 : vector<128xf32> to vector<128x1xf32>
    %46 = vector.broadcast %9 : vector<1x1xf32> to vector<128x1xf32>
    %47 = arith.addf %45, %46 : vector<128x1xf32>
    %48 = vector.shape_cast %47 : vector<128x1xf32> to vector<128x1xf32>
    %49 = vector.broadcast %48 : vector<128x1xf32> to vector<128x128xf32>
    %c0_19 = arith.constant 0 : index
    %c0_20 = arith.constant 0 : index
    %50 = vector.load %arg4[%c0_19, %c0_20] : memref<128x128xf32, #tpu.memory_space<vmem>>, vector<128x128xf32>
    tpu.vector_store %arg4[%c0_19, %c0_20], %49 {strides = array<i32>} : memref<128x128xf32, #tpu.memory_space<vmem>>, vector<128x128xf32>,
    return
  }
  func.func @transform_0(%arg0: i32) -> (i32, i32) {
    %c0_i32 = arith.constant 0 : i32
    %c0_i32_0 = arith.constant 0 : i32
    return %arg0, %c0_i32 : i32, i32
  }
  func.func @transform_1(%arg0: i32) -> (i32, i32) {
    %c0_i32 = arith.constant 0 : i32
    %c0_i32_0 = arith.constant 0 : i32
    %c0_i32_1 = arith.constant 0 : i32
    return %c0_i32, %c0_i32_0 : i32, i32
  }
  func.func @transform_2(%arg0: i32) -> (i32, i32) {
    %c0_i32 = arith.constant 0 : i32
    %c0_i32_0 = arith.constant 0 : i32
    %c0_i32_1 = arith.constant 0 : i32
    return %c0_i32, %c0_i32_0 : i32, i32
  }
  func.func @transform_3(%arg0: i32) -> (i32, i32) {
    %c0_i32 = arith.constant 0 : i32
    %c0_i32_0 = arith.constant 0 : i32
    return %arg0, %c0_i32 : i32, i32
  }
}

</mosaic_0001>

<llo_original>
// kernel: tpu_custom_call.1
$region0: #{tpu_custom_call.1}
  #allocation0 [shape = 'u32[]', space=smem, size = 0x4, offset = 0x4, fixed_abs, tag = 'smem constant byte address 0x4 - core index']
  #allocation1 [shape = 'u32[144,128]{1,0:T(1,128)}', space=vmem, size = 0x12000, scoped, tag = 'internal scratch']
  %s0 = inlined_call_operand.hbm [shape: bf16[128,256], index: 0, kind: input, shape index: {}]
  %s1 = inlined_call_operand.hbm [shape: bf16[264,384], index: 1, kind: input, shape index: {}]
  %s2 = inlined_call_operand.hbm [shape: bf16[640,128], index: 2, kind: input, shape index: {}]
  %s3 = inlined_call_operand.hbm [shape: f32[128,128], index: 3, kind: output, shape index: {}]
  %s4 = sld [smem:[#allocation0]]
  $region34: #{tpu_custom_call.1} parent=0
    _
  %s6 = ssub.s32 1, %s4
  %s7 = scalar_select 0, %s6, %s4
  $region1: #{tpu_custom_call.1} parent=0
    #allocation2 [shape = 'u8[65536]{0}', space=vmem, size = 0x10000, scoped, tag = 'input window, operand 0, single buffered']
    #allocation3 [shape = 's32[1]{0}', space=sflag, size = 0x4, scoped, tag = 'scoped memory for tpu_custom_call.1']
    #allocation4 [shape = 's32[1]{0}', space=sflag, size = 0x4, scoped, tag = 'scoped memory for tpu_custom_call.1']
    #allocation5 [shape = 'u8[202752]{0}', space=vmem, size = 0x31800, scoped, tag = 'input window, operand 1, single buffered']
    #allocation6 [shape = 's32[1]{0}', space=sflag, size = 0x4, scoped, tag = 'scoped memory for tpu_custom_call.1']
    #allocation7 [shape = 'u8[163840]{0}', space=vmem, size = 0x28000, scoped, tag = 'input window, operand 2, single buffered']
    #allocation8 [shape = 'u8[65536]{0}', space=vmem, size = 0x10000, scoped, tag = 'output window, operand 0, single buffered']
    %8 = vsyncpa [#allocation3], 0
    %9 = vsyncpa [#allocation6], 0
    %10 = vsyncpa [#allocation4], 0
    // Predicated region
    $region2: #{tpu_custom_call.1} parent=1 // pred_check
      _
    $region3: #{tpu_custom_call.1} parent=1 // pred_check_branch
      %12 = sbr.rel (0) target = $region5
    $region4: #{tpu_custom_call.1} parent=1 // pred_region
      %s14 = ssub.s32 2048, 2048
      %15 = vsyncadd [#allocation3], %s14
      %s16 = sshll.u32 [#allocation2], 4
      %s17 = int_to_ptr.vmem [resolvable:$true] %s16
      %22 = dma.hbm_to_vmem [thread:$0]  %s0, 2048, %s17, [#allocation3], 128, 128, 8
    $region5: #{tpu_custom_call.1} parent=1 // pred_fallthru
      _
    // Predicated region
    $region6: #{tpu_custom_call.1} parent=1 // pred_check
      _
    $region7: #{tpu_custom_call.1} parent=1 // pred_check_branch
      %24 = sbr.rel (0) target = $region9
    $region8: #{tpu_custom_call.1} parent=1 // pred_region
      %s26 = ssub.s32 6336, 6336
      %27 = vsyncadd [#allocation6], %s26
      %s28 = sshll.u32 [#allocation5], 4
      %s29 = int_to_ptr.vmem [resolvable:$true] %s28
      %34 = dma.hbm_to_vmem [thread:$0]  %s1, 6336, %s29, [#allocation6], 192, 192, 12
    $region9: #{tpu_custom_call.1} parent=1 // pred_fallthru
      _
    // Predicated region
    $region10: #{tpu_custom_call.1} parent=1 // pred_check
      _
    $region11: #{tpu_custom_call.1} parent=1 // pred_check_branch
      %36 = sbr.rel (0) target = $region13
    $region12: #{tpu_custom_call.1} parent=1 // pred_region
      %s38 = ssub.s32 5120, 5120
      %39 = vsyncadd [#allocation6], %s38
      %s40 = sshll.u32 [#allocation7], 4
      %s41 = int_to_ptr.vmem [resolvable:$true] %s40
      %46 = dma.hbm_to_vmem [thread:$0]  %s2, 5120, %s41, [#allocation6], 64, 64, 4
    $region13: #{tpu_custom_call.1} parent=1 // pred_fallthru
      _
    // Predicated region
    $region14: #{tpu_custom_call.1} parent=1 // pred_check
      _
    $region15: #{tpu_custom_call.1} parent=1 // pred_check_branch
      %48 = sbr.rel (0) target = $region17
    $region16: #{tpu_custom_call.1} parent=1 // pred_region
      %49 = dma.done [#allocation3], 2048
    $region17: #{tpu_custom_call.1} parent=1 // pred_fallthru
      _
    // Predicated region
    $region18: #{tpu_custom_call.1} parent=1 // pred_check
      _
    $region19: #{tpu_custom_call.1} parent=1 // pred_check_branch
      %51 = sbr.rel (0) target = $region21
    $region20: #{tpu_custom_call.1} parent=1 // pred_region
      %52 = dma.done [#allocation6], 6336
    $region21: #{tpu_custom_call.1} parent=1 // pred_fallthru
      _
    // Predicated region
    $region22: #{tpu_custom_call.1} parent=1 // pred_check
      _
    $region23: #{tpu_custom_call.1} parent=1 // pred_check_branch
      %54 = sbr.rel (0) target = $region25
    $region24: #{tpu_custom_call.1} parent=1 // pred_region
      %55 = dma.done [#allocation6], 5120
    $region25: #{tpu_custom_call.1} parent=1 // pred_fallthru
      _
    %v57 = vld [vmem:[#allocation2] sm:$0xff]
    %v58 = vld [vmem:[#allocation2 + $0x8] sm:$0xff]
    %v59 = vld [vmem:[#allocation2 + $0x10] sm:$0xff]
    %v60 = vld [vmem:[#allocation2 + $0x18] sm:$0xff]
    %v61 = vld [vmem:[#allocation2 + $0x20] sm:$0xff]
    %v62 = vld [vmem:[#allocation2 + $0x28] sm:$0xff]
    %v63 = vld [vmem:[#allocation2 + $0x30] sm:$0xff]
    %v64 = vld [vmem:[#allocation2 + $0x38] sm:$0xff]
    %v65 = vld [vmem:[#allocation2 + $0x40] sm:$0xff]
    %v66 = vld [vmem:[#allocation2 + $0x48] sm:$0xff]
    %v67 = vld [vmem:[#allocation2 + $0x50] sm:$0xff]
    %v68 = vld [vmem:[#allocation2 + $0x58] sm:$0xff]
    %v69 = vld [vmem:[#allocation2 + $0x60] sm:$0xff]
    %v70 = vld [vmem:[#allocation2 + $0x68] sm:$0xff]
    %v71 = vld [vmem:[#allocation2 + $0x70] sm:$0xff]
    %v72 = vld [vmem:[#allocation2 + $0x78] sm:$0xff]
    %v73 = vld [vmem:[#allocation5] sm:$0xff]
    %v74 = vld [vmem:[#allocation5 + $0x8] sm:$0xf]
    %v75 = vld [vmem:[#allocation5 + $0xc] sm:$0xff]
    %v76 = vld [vmem:[#allocation5 + $0x14] sm:$0xf]
    %v77 = vld [vmem:[#allocation5 + $0x18] sm:$0xff]
    %v78 = vld [vmem:[#allocation5 + $0x20] sm:$0xf]
    %v79 = vld [vmem:[#allocation5 + $0x24] sm:$0xff]
    %v80 = vld [vmem:[#allocation5 + $0x2c] sm:$0xf]
    %v81 = vld [vmem:[#allocation5 + $0x30] sm:$0xff]
    %v82 = vld [vmem:[#allocation5 + $0x38] sm:$0xf]
    %v83 = vld [vmem:[#allocation5 + $0x3c] sm:$0xff]
    %v84 = vld [vmem:[#allocation5 + $0x44] sm:$0xf]
    %v85 = vld [vmem:[#allocation5 + $0x48] sm:$0xff]
    %v86 = vld [vmem:[#allocation5 + $0x50] sm:$0xf]
    %v87 = vld [vmem:[#allocation5 + $0x54] sm:$0xff]
    %v88 = vld [vmem:[#allocation5 + $0x5c] sm:$0xf]
    %v89 = vld [vmem:[#allocation5 + $0x60] sm:$0xff]
    %v90 = vld [vmem:[#allocation5 + $0x68] sm:$0xf]
    %v91 = vld [vmem:[#allocation5 + $0x6c] sm:$0xff]
    %v92 = vld [vmem:[#allocation5 + $0x74] sm:$0xf]
    %v93 = vld [vmem:[#allocation5 + $0x78] sm:$0xff]
    %v94 = vld [vmem:[#allocation5 + $0x80] sm:$0xf]
    %v95 = vld [vmem:[#allocation5 + $0x84] sm:$0xff]
    %v96 = vld [vmem:[#allocation5 + $0x8c] sm:$0xf]
    %v97 = vld [vmem:[#allocation5 + $0x90] sm:$0xff]
    %v98 = vld [vmem:[#allocation5 + $0x98] sm:$0xf]
    %v99 = vld [vmem:[#allocation5 + $0x9c] sm:$0xff]
    %v100 = vld [vmem:[#allocation5 + $0xa4] sm:$0xf]
    %v101 = vld [vmem:[#allocation5 + $0xa8] sm:$0xff]
    %v102 = vld [vmem:[#allocation5 + $0xb0] sm:$0xf]
    %v103 = vld [vmem:[#allocation5 + $0xb4] sm:$0xff]
    %v104 = vld [vmem:[#allocation5 + $0xbc] sm:$0xf]
    %v105 = vld [vmem:[#allocation5 + $0xc0] sm:$0xff]
    %v106 = vld [vmem:[#allocation5 + $0xc8] sm:$0xf]
    %v107 = vld [vmem:[#allocation5 + $0xcc] sm:$0xff]
    %v108 = vld [vmem:[#allocation5 + $0xd4] sm:$0xf]
    %v109 = vld [vmem:[#allocation5 + $0xd8] sm:$0xff]
    %v110 = vld [vmem:[#allocation5 + $0xe0] sm:$0xf]
    %v111 = vld [vmem:[#allocation5 + $0xe4] sm:$0xff]
    %v112 = vld [vmem:[#allocation5 + $0xec] sm:$0xf]
    %v113 = vld [vmem:[#allocation5 + $0xf0] sm:$0xff]
    %v114 = vld [vmem:[#allocation5 + $0xf8] sm:$0xf]
    %v115 = vld [vmem:[#allocation5 + $0xfc] sm:$0xff]
    %v116 = vld [vmem:[#allocation5 + $0x104] sm:$0xf]
    %v117 = vld [vmem:[#allocation5 + $0x108] sm:$0xff]
    %v118 = vld [vmem:[#allocation5 + $0x110] sm:$0xf]
    %v119 = vld [vmem:[#allocation5 + $0x114] sm:$0xff]
    %v120 = vld [vmem:[#allocation5 + $0x11c] sm:$0xf]
    %v121 = vld [vmem:[#allocation5 + $0x120] sm:$0xff]
    %v122 = vld [vmem:[#allocation5 + $0x128] sm:$0xf]
    %v123 = vld [vmem:[#allocation5 + $0x12c] sm:$0xff]
    %v124 = vld [vmem:[#allocation5 + $0x134] sm:$0xf]
    %v125 = vld [vmem:[#allocation5 + $0x138] sm:$0xff]
    %v126 = vld [vmem:[#allocation5 + $0x140] sm:$0xf]
    %v127 = vld [vmem:[#allocation5 + $0x144] sm:$0xff]
    %v128 = vld [vmem:[#allocation5 + $0x14c] sm:$0xf]
    %v129 = vld [vmem:[#allocation5 + $0x150] sm:$0xff]
    %v130 = vld [vmem:[#allocation5 + $0x158] sm:$0xf]
    %v131 = vld [vmem:[#allocation5 + $0x15c] sm:$0xff]
    %v132 = vld [vmem:[#allocation5 + $0x164] sm:$0xf]
    %v133 = vld [vmem:[#allocation5 + $0x168] sm:$0xff]
    %v134 = vld [vmem:[#allocation5 + $0x170] sm:$0xf]
    %v135 = vld [vmem:[#allocation5 + $0x174] sm:$0xff]
    %v136 = vld [vmem:[#allocation5 + $0x17c] sm:$0xf]
    %v137 = vld [vmem:[#allocation5 + $0x180] sm:$0xff]
    %v138 = vld [vmem:[#allocation5 + $0x188] sm:$0xf]
    %v139 = vunpack.c.l.bf16 %v137
    %v140 = vunpack.c.h.bf16 %v137
    %v141 = vunpack.c.l.bf16 %v138
    %v142 = vlaneseq
    %v143 = vshrl.u32 %v142, 7
    %v144 = vsub.s32 0, %v143
    %v145 = vrot.slane %v139, %v144
    %v146 = vlaneseq
    %v147 = vshrl.u32 %v146, 7
    %v148 = vsub.s32 0, %v147
    %v149 = vrot.slane %v140, %v148
    %v150 = vlaneseq
    %v151 = vshrl.u32 %v150, 7
    %v152 = vsub.s32 0, %v151
    %v153 = vrot.slane %v141, %v152
    %v170 = vunpack.c.l.b16 %v57
    %v171 = vunpack.c.h.b16 %v57
    %v172 = vunpack.c.l.b16 %v58
    %v173 = vunpack.c.h.b16 %v58
    %v174 = vunpack.c.l.b16 %v59
    %v175 = vunpack.c.h.b16 %v59
    %v176 = vunpack.c.l.b16 %v60
    %v177 = vunpack.c.h.b16 %v60
    %v178 = vunpack.c.l.b16 %v61
    %v179 = vunpack.c.h.b16 %v61
    %v180 = vunpack.c.l.b16 %v62
    %v181 = vunpack.c.h.b16 %v62
    %v182 = vunpack.c.l.b16 %v63
    %v183 = vunpack.c.h.b16 %v63
    %v184 = vunpack.c.l.b16 %v64
    %v185 = vunpack.c.h.b16 %v64
    %v186 = vunpack.c.l.b16 %v65
    %v187 = vunpack.c.h.b16 %v65
    %v188 = vunpack.c.l.b16 %v66
    %v189 = vunpack.c.h.b16 %v66
    %v190 = vunpack.c.l.b16 %v67
    %v191 = vunpack.c.h.b16 %v67
    %v192 = vunpack.c.l.b16 %v68
    %v193 = vunpack.c.h.b16 %v68
    %v194 = vunpack.c.l.b16 %v69
    %v195 = vunpack.c.h.b16 %v69
    %v196 = vunpack.c.l.b16 %v70
    %v197 = vunpack.c.h.b16 %v70
    %v198 = vunpack.c.l.b16 %v71
    %v199 = vunpack.c.h.b16 %v71
    %v200 = vunpack.c.l.b16 %v72
    %v201 = vunpack.c.h.b16 %v72
    %v202 = vpack.c.b16 %v172, %v170
    %v203 = vpack.c.b16 %v173, %v171
    %v204 = vpack.c.b16 %v176, %v174
    %v205 = vpack.c.b16 %v177, %v175
    %v206 = vpack.c.b16 %v180, %v178
    %v207 = vpack.c.b16 %v181, %v179
    %v208 = vpack.c.b16 %v184, %v182
    %v209 = vpack.c.b16 %v185, %v183
    %v210 = vpack.c.b16 %v188, %v186
    %v211 = vpack.c.b16 %v189, %v187
    %v212 = vpack.c.b16 %v192, %v190
    %v213 = vpack.c.b16 %v193, %v191
    %v214 = vpack.c.b16 %v196, %v194
    %v215 = vpack.c.b16 %v197, %v195
    %v216 = vpack.c.b16 %v200, %v198
    %v217 = vpack.c.b16 %v201, %v199
    %v298 = vunpack.c.l.b16 %v73
    %v299 = vunpack.c.h.b16 %v73
    %v300 = vunpack.c.l.b16 %v74
    %v301 = vunpack.c.l.b16 %v75
    %v302 = vunpack.c.h.b16 %v75
    %v303 = vunpack.c.l.b16 %v76
    %v304 = vunpack.c.l.b16 %v77
    %v305 = vunpack.c.h.b16 %v77
    %v306 = vunpack.c.l.b16 %v78
    %v307 = vunpack.c.l.b16 %v79
    %v308 = vunpack.c.h.b16 %v79
    %v309 = vunpack.c.l.b16 %v80
    %v310 = vunpack.c.l.b16 %v81
    %v311 = vunpack.c.h.b16 %v81
    %v312 = vunpack.c.l.b16 %v82
    %v313 = vunpack.c.l.b16 %v83
    %v314 = vunpack.c.h.b16 %v83
    %v315 = vunpack.c.l.b16 %v84
    %v316 = vunpack.c.l.b16 %v85
    %v317 = vunpack.c.h.b16 %v85
    %v318 = vunpack.c.l.b16 %v86
    %v319 = vunpack.c.l.b16 %v87
    %v320 = vunpack.c.h.b16 %v87
    %v321 = vunpack.c.l.b16 %v88
    %v322 = vunpack.c.l.b16 %v89
    %v323 = vunpack.c.h.b16 %v89
    %v324 = vunpack.c.l.b16 %v90
    %v325 = vunpack.c.l.b16 %v91
    %v326 = vunpack.c.h.b16 %v91
    %v327 = vunpack.c.l.b16 %v92
    %v328 = vunpack.c.l.b16 %v93
    %v329 = vunpack.c.h.b16 %v93
    %v330 = vunpack.c.l.b16 %v94
    %v331 = vunpack.c.l.b16 %v95
    %v332 = vunpack.c.h.b16 %v95
    %v333 = vunpack.c.l.b16 %v96
    %v334 = vunpack.c.l.b16 %v97
    %v335 = vunpack.c.h.b16 %v97
    %v336 = vunpack.c.l.b16 %v98
    %v337 = vunpack.c.l.b16 %v99
    %v338 = vunpack.c.h.b16 %v99
    %v339 = vunpack.c.l.b16 %v100
    %v340 = vunpack.c.l.b16 %v101
    %v341 = vunpack.c.h.b16 %v101
    %v342 = vunpack.c.l.b16 %v102
    %v343 = vunpack.c.l.b16 %v103
    %v344 = vunpack.c.h.b16 %v103
    %v345 = vunpack.c.l.b16 %v104
    %v346 = vunpack.c.l.b16 %v105
    %v347 = vunpack.c.h.b16 %v105
    %v348 = vunpack.c.l.b16 %v106
    %v349 = vunpack.c.l.b16 %v107
    %v350 = vunpack.c.h.b16 %v107
    %v351 = vunpack.c.l.b16 %v108
    %v352 = vunpack.c.l.b16 %v109
    %v353 = vunpack.c.h.b16 %v109
    %v354 = vunpack.c.l.b16 %v110
    %v355 = vunpack.c.l.b16 %v111
    %v356 = vunpack.c.h.b16 %v111
    %v357 = vunpack.c.l.b16 %v112
    %v358 = vunpack.c.l.b16 %v113
    %v359 = vunpack.c.h.b16 %v113
    %v360 = vunpack.c.l.b16 %v114
    %v361 = vunpack.c.l.b16 %v115
    %v362 = vunpack.c.h.b16 %v115
    %v363 = vunpack.c.l.b16 %v116
    %v364 = vunpack.c.l.b16 %v117
    %v365 = vunpack.c.h.b16 %v117
    %v366 = vunpack.c.l.b16 %v118
    %v367 = vunpack.c.l.b16 %v119
    %v368 = vunpack.c.h.b16 %v119
    %v369 = vunpack.c.l.b16 %v120
    %v370 = vunpack.c.l.b16 %v121
    %v371 = vunpack.c.h.b16 %v121
    %v372 = vunpack.c.l.b16 %v122
    %v373 = vunpack.c.l.b16 %v123
    %v374 = vunpack.c.h.b16 %v123
    %v375 = vunpack.c.l.b16 %v124
    %v376 = vunpack.c.l.b16 %v125
    %v377 = vunpack.c.h.b16 %v125
    %v378 = vunpack.c.l.b16 %v126
    %v379 = vunpack.c.l.b16 %v127
    %v380 = vunpack.c.h.b16 %v127
    %v381 = vunpack.c.l.b16 %v128
    %v382 = vunpack.c.l.b16 %v129
    %v383 = vunpack.c.h.b16 %v129
    %v384 = vunpack.c.l.b16 %v130
    %v385 = vunpack.c.l.b16 %v131
    %v386 = vunpack.c.h.b16 %v131
    %v387 = vunpack.c.l.b16 %v132
    %v388 = vunpack.c.l.b16 %v133
    %v389 = vunpack.c.h.b16 %v133
    %v390 = vunpack.c.l.b16 %v134
    %v391 = vunpack.c.l.b16 %v135
    %v392 = vunpack.c.h.b16 %v135
    %v393 = vunpack.c.l.b16 %v136
    %v394 = vpack.c.b16 %v301, %v298
    %v395 = vpack.c.b16 %v302, %v299
    %v396 = vpack.c.b16 %v303, %v300
    %v397 = vpack.c.b16 %v307, %v304
    %v398 = vpack.c.b16 %v308, %v305
    %v399 = vpack.c.b16 %v309, %v306
    %v400 = vpack.c.b16 %v313, %v310
    %v401 = vpack.c.b16 %v314, %v311
    %v402 = vpack.c.b16 %v315, %v312
    %v403 = vpack.c.b16 %v319, %v316
    %v404 = vpack.c.b16 %v320, %v317
    %v405 = vpack.c.b16 %v321, %v318
    %v406 = vpack.c.b16 %v325, %v322
    %v407 = vpack.c.b16 %v326, %v323
    %v408 = vpack.c.b16 %v327, %v324
    %v409 = vpack.c.b16 %v331, %v328
    %v410 = vpack.c.b16 %v332, %v329
    %v411 = vpack.c.b16 %v333, %v330
    %v412 = vpack.c.b16 %v337, %v334
    %v413 = vpack.c.b16 %v338, %v335
    %v414 = vpack.c.b16 %v339, %v336
    %v415 = vpack.c.b16 %v343, %v340
    %v416 = vpack.c.b16 %v344, %v341
    %v417 = vpack.c.b16 %v345, %v342
    %v418 = vpack.c.b16 %v349, %v346
    %v419 = vpack.c.b16 %v350, %v347
    %v420 = vpack.c.b16 %v351, %v348
    %v421 = vpack.c.b16 %v355, %v352
    %v422 = vpack.c.b16 %v356, %v353
    %v423 = vpack.c.b16 %v357, %v354
    %v424 = vpack.c.b16 %v361, %v358
    %v425 = vpack.c.b16 %v362, %v359
    %v426 = vpack.c.b16 %v363, %v360
    %v427 = vpack.c.b16 %v367, %v364
    %v428 = vpack.c.b16 %v368, %v365
    %v429 = vpack.c.b16 %v369, %v366
    %v430 = vpack.c.b16 %v373, %v370
    %v431 = vpack.c.b16 %v374, %v371
    %v432 = vpack.c.b16 %v375, %v372
    %v433 = vpack.c.b16 %v379, %v376
    %v434 = vpack.c.b16 %v380, %v377
    %v435 = vpack.c.b16 %v381, %v378
    %v436 = vpack.c.b16 %v385, %v382
    %v437 = vpack.c.b16 %v386, %v383
    %v438 = vpack.c.b16 %v387, %v384
    %v439 = vpack.c.b16 %v391, %v388
    %v440 = vpack.c.b16 %v392, %v389
    %v441 = vpack.c.b16 %v393, %v390
    %490 = vmatprep.subr.bf16.mxu0 %v416
    %491 = vmatpush1.bf16.msra.mxu0 %v415
    %492 = vmatprep.subr.bf16.mxu0 %v413
    %493 = vmatpush1.bf16.msra.mxu0 %v412
    %494 = vmatprep.subr.bf16.mxu0 %v410
    %495 = vmatpush1.bf16.msra.mxu0 %v409
    %496 = vmatprep.subr.bf16.mxu0 %v407
    %497 = vmatpush1.bf16.msra.mxu0 %v406
    %498 = vmatprep.subr.bf16.mxu0 %v404
    %499 = vmatpush1.bf16.msra.mxu0 %v403
    %500 = vmatprep.subr.bf16.mxu0 %v401
    %501 = vmatpush1.bf16.msra.mxu0 %v400
    %502 = vmatprep.subr.bf16.mxu0 %v398
    %503 = vmatpush1.bf16.msra.mxu0 %v397
    %504 = vmatprep.subr.bf16.mxu0 %v395
    %505 = vmatpush1.bf16.msra.mxu0 %v394
    %506 = vmatprep.subr.bf16.mxu0 %v440
    %507 = vmatpush2.bf16.msra.mxu0 %v439
    %508 = vmatprep.subr.bf16.mxu0 %v437
    %509 = vmatpush2.bf16.msra.mxu0 %v436
    %510 = vmatprep.subr.bf16.mxu0 %v434
    %511 = vmatpush2.bf16.msra.mxu0 %v433
    %512 = vmatprep.subr.bf16.mxu0 %v431
    %513 = vmatpush2.bf16.msra.mxu0 %v430
    %514 = vmatprep.subr.bf16.mxu0 %v428
    %515 = vmatpush2.bf16.msra.mxu0 %v427
    %516 = vmatprep.subr.bf16.mxu0 %v425
    %517 = vmatpush2.bf16.msra.mxu0 %v424
    %518 = vmatprep.subr.bf16.mxu0 %v422
    %519 = vmatpush2.bf16.msra.mxu0 %v421
    %520 = vmatprep.subr.bf16.mxu0 %v419
    %521 = vmatpush2.bf16.msra.mxu0 %v418
    %522 = vmatprep.mubr.bf16.mxu0 %v203
    %523 = vmatmul.mubr.bf16.gmra.mxu0 %v202
    %v524 = vpop.f32.mrf.mxu0
    %v525 = vadd.f32 %v145, %v524
    %v526 = vpop.f32.mrf.mxu0
    %v527 = vadd.f32 %v149, %v526
    %v528 = vpop.f32.mrf.mxu0
    %v529 = vadd.f32 %v145, %v528
    %v530 = vpop.f32.mrf.mxu0
    %v531 = vadd.f32 %v149, %v530
    %532 = vmatprep.mubr.bf16.mxu0 %v205
    %533 = vmatmul.mubr.bf16.gmra.mxu0 %v204
    %v534 = vpop.f32.mrf.mxu0
    %v535 = vadd.f32 %v145, %v534
    %v536 = vpop.f32.mrf.mxu0
    %v537 = vadd.f32 %v149, %v536
    %v538 = vpop.f32.mrf.mxu0
    %v539 = vadd.f32 %v145, %v538
    %v540 = vpop.f32.mrf.mxu0
    %v541 = vadd.f32 %v149, %v540
    %542 = vmatprep.mubr.bf16.mxu0 %v207
    %543 = vmatmul.mubr.bf16.gmra.mxu0 %v206
    %v544 = vpop.f32.mrf.mxu0
    %v545 = vadd.f32 %v145, %v544
    %v546 = vpop.f32.mrf.mxu0
    %v547 = vadd.f32 %v149, %v546
    %v548 = vpop.f32.mrf.mxu0
    %v549 = vadd.f32 %v145, %v548
    %v550 = vpop.f32.mrf.mxu0
    %v551 = vadd.f32 %v149, %v550
    %552 = vmatprep.mubr.bf16.mxu0 %v209
    %553 = vmatmul.mubr.bf16.gmra.mxu0 %v208
    %v554 = vpop.f32.mrf.mxu0
    %v555 = vadd.f32 %v145, %v554
    %v556 = vpop.f32.mrf.mxu0
    %v557 = vadd.f32 %v149, %v556
    %v558 = vpop.f32.mrf.mxu0
    %v559 = vadd.f32 %v145, %v558
    %v560 = vpop.f32.mrf.mxu0
    %v561 = vadd.f32 %v149, %v560
    %562 = vmatprep.mubr.bf16.mxu0 %v211
    %563 = vmatmul.mubr.bf16.gmra.mxu0 %v210
    %v564 = vpop.f32.mrf.mxu0
    %v565 = vadd.f32 %v145, %v564
    %v566 = vpop.f32.mrf.mxu0
    %v567 = vadd.f32 %v149, %v566
    %v568 = vpop.f32.mrf.mxu0
    %v569 = vadd.f32 %v145, %v568
    %v570 = vpop.f32.mrf.mxu0
    %v571 = vadd.f32 %v149, %v570
    %572 = vmatprep.mubr.bf16.mxu0 %v213
    %573 = vmatmul.mubr.bf16.gmra.mxu0 %v212
    %v574 = vpop.f32.mrf.mxu0
    %v575 = vadd.f32 %v145, %v574
    %v576 = vpop.f32.mrf.mxu0
    %v577 = vadd.f32 %v149, %v576
    %v578 = vpop.f32.mrf.mxu0
    %v579 = vadd.f32 %v145, %v578
    %v580 = vpop.f32.mrf.mxu0
    %v581 = vadd.f32 %v149, %v580
    %582 = vmatprep.mubr.bf16.mxu0 %v215
    %583 = vmatmul.mubr.bf16.gmra.mxu0 %v214
    %v584 = vpop.f32.mrf.mxu0
    %v585 = vadd.f32 %v145, %v584
    %v586 = vpop.f32.mrf.mxu0
    %v587 = vadd.f32 %v149, %v586
    %v588 = vpop.f32.mrf.mxu0
    %v589 = vadd.f32 %v145, %v588
    %v590 = vpop.f32.mrf.mxu0
    %v591 = vadd.f32 %v149, %v590
    %592 = vmatprep.mubr.bf16.mxu0 %v217
    %593 = vmatmul.mubr.bf16.gmra.mxu0 %v216
    %v594 = vpop.f32.mrf.mxu0
    %v595 = vadd.f32 %v145, %v594
    %v596 = vpop.f32.mrf.mxu0
    %v597 = vadd.f32 %v149, %v596
    %v598 = vpop.f32.mrf.mxu0
    %v599 = vadd.f32 %v145, %v598
    %v600 = vpop.f32.mrf.mxu0
    %v601 = vadd.f32 %v149, %v600
    %602 = vdwg.mxu0
    %603 = vmatprep.subr.bf16.mxu0 0
    %604 = vmatpush1.bf16.msra.mxu0 %v417
    %605 = vmatprep.subr.bf16.mxu0 0
    %606 = vmatpush1.bf16.msra.mxu0 %v414
    %607 = vmatprep.subr.bf16.mxu0 0
    %608 = vmatpush1.bf16.msra.mxu0 %v411
    %609 = vmatprep.subr.bf16.mxu0 0
    %610 = vmatpush1.bf16.msra.mxu0 %v408
    %611 = vmatprep.subr.bf16.mxu0 0
    %612 = vmatpush1.bf16.msra.mxu0 %v405
    %613 = vmatprep.subr.bf16.mxu0 0
    %614 = vmatpush1.bf16.msra.mxu0 %v402
    %615 = vmatprep.subr.bf16.mxu0 0
    %616 = vmatpush1.bf16.msra.mxu0 %v399
    %617 = vmatprep.subr.bf16.mxu0 0
    %618 = vmatpush1.bf16.msra.mxu0 %v396
    %619 = vmatprep.subr.bf16.mxu0 0
    %620 = vmatpush2.bf16.msra.mxu0 %v441
    %621 = vmatprep.subr.bf16.mxu0 0
    %622 = vmatpush2.bf16.msra.mxu0 %v438
    %623 = vmatprep.subr.bf16.mxu0 0
    %624 = vmatpush2.bf16.msra.mxu0 %v435
    %625 = vmatprep.subr.bf16.mxu0 0
    %626 = vmatpush2.bf16.msra.mxu0 %v432
    %627 = vmatprep.subr.bf16.mxu0 0
    %628 = vmatpush2.bf16.msra.mxu0 %v429
    %629 = vmatprep.subr.bf16.mxu0 0
    %630 = vmatpush2.bf16.msra.mxu0 %v426
    %631 = vmatprep.subr.bf16.mxu0 0
    %632 = vmatpush2.bf16.msra.mxu0 %v423
    %633 = vmatprep.subr.bf16.mxu0 0
    %634 = vmatpush2.bf16.msra.mxu0 %v420
    %635 = vmatprep.mubr.bf16.mxu0 %v203
    %636 = vmatmul.mubr.bf16.gmra.mxu0 %v202
    %v637 = vpop.f32.mrf.mxu0
    %v638 = vadd.f32 %v153, %v637
    %v639 = vpop.f32.mrf.mxu0
    %v640 = vpop.f32.mrf.mxu0
    %v641 = vadd.f32 %v153, %v640
    %v642 = vpop.f32.mrf.mxu0
    %643 = vmatprep.mubr.bf16.mxu0 %v205
    %644 = vmatmul.mubr.bf16.gmra.mxu0 %v204
    %v645 = vpop.f32.mrf.mxu0
    %v646 = vadd.f32 %v153, %v645
    %v647 = vpop.f32.mrf.mxu0
    %v648 = vpop.f32.mrf.mxu0
    %v649 = vadd.f32 %v153, %v648
    %v650 = vpop.f32.mrf.mxu0
    %651 = vmatprep.mubr.bf16.mxu0 %v207
    %652 = vmatmul.mubr.bf16.gmra.mxu0 %v206
    %v653 = vpop.f32.mrf.mxu0
    %v654 = vadd.f32 %v153, %v653
    %v655 = vpop.f32.mrf.mxu0
    %v656 = vpop.f32.mrf.mxu0
    %v657 = vadd.f32 %v153, %v656
    %v658 = vpop.f32.mrf.mxu0
    %659 = vmatprep.mubr.bf16.mxu0 %v209
    %660 = vmatmul.mubr.bf16.gmra.mxu0 %v208
    %v661 = vpop.f32.mrf.mxu0
    %v662 = vadd.f32 %v153, %v661
    %v663 = vpop.f32.mrf.mxu0
    %v664 = vpop.f32.mrf.mxu0
    %v665 = vadd.f32 %v153, %v664
    %v666 = vpop.f32.mrf.mxu0
    %667 = vmatprep.mubr.bf16.mxu0 %v211
    %668 = vmatmul.mubr.bf16.gmra.mxu0 %v210
    %v669 = vpop.f32.mrf.mxu0
    %v670 = vadd.f32 %v153, %v669
    %v671 = vpop.f32.mrf.mxu0
    %v672 = vpop.f32.mrf.mxu0
    %v673 = vadd.f32 %v153, %v672
    %v674 = vpop.f32.mrf.mxu0
    %675 = vmatprep.mubr.bf16.mxu0 %v213
    %676 = vmatmul.mubr.bf16.gmra.mxu0 %v212
    %v677 = vpop.f32.mrf.mxu0
    %v678 = vadd.f32 %v153, %v677
    %v679 = vpop.f32.mrf.mxu0
    %v680 = vpop.f32.mrf.mxu0
    %v681 = vadd.f32 %v153, %v680
    %v682 = vpop.f32.mrf.mxu0
    %683 = vmatprep.mubr.bf16.mxu0 %v215
    %684 = vmatmul.mubr.bf16.gmra.mxu0 %v214
    %v685 = vpop.f32.mrf.mxu0
    %v686 = vadd.f32 %v153, %v685
    %v687 = vpop.f32.mrf.mxu0
    %v688 = vpop.f32.mrf.mxu0
    %v689 = vadd.f32 %v153, %v688
    %v690 = vpop.f32.mrf.mxu0
    %691 = vmatprep.mubr.bf16.mxu0 %v217
    %692 = vmatmul.mubr.bf16.gmra.mxu0 %v216
    %v693 = vpop.f32.mrf.mxu0
    %v694 = vadd.f32 %v153, %v693
    %v695 = vpop.f32.mrf.mxu0
    %v696 = vpop.f32.mrf.mxu0
    %v697 = vadd.f32 %v153, %v696
    %v698 = vpop.f32.mrf.mxu0
    %699 = vdwg.mxu0
    %v700 = vmax.f32 %v525, 0.0
    %v701 = vmax.f32 %v527, 0.0
    %v702 = vmax.f32 %v638, 0.0
    %v703 = vmax.f32 %v529, 0.0
    %v704 = vmax.f32 %v531, 0.0
    %v705 = vmax.f32 %v641, 0.0
    %v706 = vmax.f32 %v535, 0.0
    %v707 = vmax.f32 %v537, 0.0
    %v708 = vmax.f32 %v646, 0.0
    %v709 = vmax.f32 %v539, 0.0
    %v710 = vmax.f32 %v541, 0.0
    %v711 = vmax.f32 %v649, 0.0
    %v712 = vmax.f32 %v545, 0.0
    %v713 = vmax.f32 %v547, 0.0
    %v714 = vmax.f32 %v654, 0.0
    %v715 = vmax.f32 %v549, 0.0
    %v716 = vmax.f32 %v551, 0.0
    %v717 = vmax.f32 %v657, 0.0
    %v718 = vmax.f32 %v555, 0.0
    %v719 = vmax.f32 %v557, 0.0
    %v720 = vmax.f32 %v662, 0.0
    %v721 = vmax.f32 %v559, 0.0
    %v722 = vmax.f32 %v561, 0.0
    %v723 = vmax.f32 %v665, 0.0
    %v724 = vmax.f32 %v565, 0.0
    %v725 = vmax.f32 %v567, 0.0
    %v726 = vmax.f32 %v670, 0.0
    %v727 = vmax.f32 %v569, 0.0
    %v728 = vmax.f32 %v571, 0.0
    %v729 = vmax.f32 %v673, 0.0
    %v730 = vmax.f32 %v575, 0.0
    %v731 = vmax.f32 %v577, 0.0
    %v732 = vmax.f32 %v678, 0.0
    %v733 = vmax.f32 %v579, 0.0
    %v734 = vmax.f32 %v581, 0.0
    %v735 = vmax.f32 %v681, 0.0
    %v736 = vmax.f32 %v585, 0.0
    %v737 = vmax.f32 %v587, 0.0
    %v738 = vmax.f32 %v686, 0.0
    %v739 = vmax.f32 %v589, 0.0
    %v740 = vmax.f32 %v591, 0.0
    %v741 = vmax.f32 %v689, 0.0
    %v742 = vmax.f32 %v595, 0.0
    %v743 = vmax.f32 %v597, 0.0
    %v744 = vmax.f32 %v694, 0.0
    %v745 = vmax.f32 %v599, 0.0
    %v746 = vmax.f32 %v601, 0.0
    %v747 = vmax.f32 %v697, 0.0
    %v748 = vpack.c.bf16 %v703, %v700
    %v749 = vpack.c.bf16 %v704, %v701
    %v750 = vpack.c.bf16 %v709, %v706
    %v751 = vpack.c.bf16 %v710, %v707
    %v752 = vpack.c.bf16 %v715, %v712
    %v753 = vpack.c.bf16 %v716, %v713
    %v754 = vpack.c.bf16 %v721, %v718
    %v755 = vpack.c.bf16 %v722, %v719
    %v756 = vpack.c.bf16 %v727, %v724
    %v757 = vpack.c.bf16 %v728, %v725
    %v758 = vpack.c.bf16 %v733, %v730
    %v759 = vpack.c.bf16 %v734, %v731
    %v760 = vpack.c.bf16 %v739, %v736
    %v761 = vpack.c.bf16 %v740, %v737
    %v762 = vpack.c.bf16 %v745, %v742
    %v763 = vpack.c.bf16 %v746, %v743
    %v764 = vpack.c.bf16 %v705, %v702
    %v765 = vpack.c.bf16 %v711, %v708
    %v766 = vpack.c.bf16 %v717, %v714
    %v767 = vpack.c.bf16 %v723, %v720
    %v768 = vpack.c.bf16 %v729, %v726
    %v769 = vpack.c.bf16 %v735, %v732
    %v770 = vpack.c.bf16 %v741, %v738
    %v771 = vpack.c.bf16 %v747, %v744
    %v772 = vld [vmem:[#allocation7] sm:$0xf]
    %v773 = vld [vmem:[#allocation7 + $0x4] sm:$0xf]
    %v774 = vld [vmem:[#allocation7 + $0x8] sm:$0xf]
    %v775 = vld [vmem:[#allocation7 + $0xc] sm:$0xf]
    %v776 = vld [vmem:[#allocation7 + $0x10] sm:$0xf]
    %v777 = vld [vmem:[#allocation7 + $0x14] sm:$0xf]
    %v778 = vld [vmem:[#allocation7 + $0x18] sm:$0xf]
    %v779 = vld [vmem:[#allocation7 + $0x1c] sm:$0xf]
    %v780 = vld [vmem:[#allocation7 + $0x20] sm:$0xf]
    %v781 = vld [vmem:[#allocation7 + $0x24] sm:$0xf]
    %v782 = vld [vmem:[#allocation7 + $0x28] sm:$0xf]
    %v783 = vld [vmem:[#allocation7 + $0x2c] sm:$0xf]
    %v784 = vld [vmem:[#allocation7 + $0x30] sm:$0xf]
    %v785 = vld [vmem:[#allocation7 + $0x34] sm:$0xf]
    %v786 = vld [vmem:[#allocation7 + $0x38] sm:$0xf]
    %v787 = vld [vmem:[#allocation7 + $0x3c] sm:$0xf]
    %v788 = vld [vmem:[#allocation7 + $0x40] sm:$0xf]
    %v789 = vld [vmem:[#allocation7 + $0x44] sm:$0xf]
    %v790 = vld [vmem:[#allocation7 + $0x48] sm:$0xf]
    %v791 = vld [vmem:[#allocation7 + $0x4c] sm:$0xf]
    %v792 = vld [vmem:[#allocation7 + $0x50] sm:$0xf]
    %v793 = vld [vmem:[#allocation7 + $0x54] sm:$0xf]
    %v794 = vld [vmem:[#allocation7 + $0x58] sm:$0xf]
    %v795 = vld [vmem:[#allocation7 + $0x5c] sm:$0xf]
    %v796 = vld [vmem:[#allocation7 + $0x60] sm:$0xf]
    %v797 = vld [vmem:[#allocation7 + $0x64] sm:$0xf]
    %v798 = vld [vmem:[#allocation7 + $0x68] sm:$0xf]
    %v799 = vld [vmem:[#allocation7 + $0x6c] sm:$0xf]
    %v800 = vld [vmem:[#allocation7 + $0x70] sm:$0xf]
    %v801 = vld [vmem:[#allocation7 + $0x74] sm:$0xf]
    %v802 = vld [vmem:[#allocation7 + $0x78] sm:$0xf]
    %v803 = vld [vmem:[#allocation7 + $0x7c] sm:$0xf]
    %v804 = vlaneseq
    %v805 = vshrl.u32 %v804, 7
    %v806 = vsub.s32 1, %v805
    %v807 = vrot.slane %v139, %v806
    %v840 = vunpack.c.l.b16 %v772
    %v841 = vunpack.c.l.b16 %v773
    %v842 = vunpack.c.l.b16 %v774
    %v843 = vunpack.c.l.b16 %v775
    %v844 = vunpack.c.l.b16 %v776
    %v845 = vunpack.c.l.b16 %v777
    %v846 = vunpack.c.l.b16 %v778
    %v847 = vunpack.c.l.b16 %v779
    %v848 = vunpack.c.l.b16 %v780
    %v849 = vunpack.c.l.b16 %v781
    %v850 = vunpack.c.l.b16 %v782
    %v851 = vunpack.c.l.b16 %v783
    %v852 = vunpack.c.l.b16 %v784
    %v853 = vunpack.c.l.b16 %v785
    %v854 = vunpack.c.l.b16 %v786
    %v855 = vunpack.c.l.b16 %v787
    %v856 = vunpack.c.l.b16 %v788
    %v857 = vunpack.c.l.b16 %v789
    %v858 = vunpack.c.l.b16 %v790
    %v859 = vunpack.c.l.b16 %v791
    %v860 = vunpack.c.l.b16 %v792
    %v861 = vunpack.c.l.b16 %v793
    %v862 = vunpack.c.l.b16 %v794
    %v863 = vunpack.c.l.b16 %v795
    %v864 = vunpack.c.l.b16 %v796
    %v865 = vunpack.c.l.b16 %v797
    %v866 = vunpack.c.l.b16 %v798
    %v867 = vunpack.c.l.b16 %v799
    %v868 = vunpack.c.l.b16 %v800
    %v869 = vunpack.c.l.b16 %v801
    %v870 = vunpack.c.l.b16 %v802
    %v871 = vunpack.c.l.b16 %v803
    %v872 = vpack.c.b16 %v841, %v840
    %v873 = vpack.c.b16 %v843, %v842
    %v874 = vpack.c.b16 %v845, %v844
    %v875 = vpack.c.b16 %v847, %v846
    %v876 = vpack.c.b16 %v849, %v848
    %v877 = vpack.c.b16 %v851, %v850
    %v878 = vpack.c.b16 %v853, %v852
    %v879 = vpack.c.b16 %v855, %v854
    %v880 = vpack.c.b16 %v857, %v856
    %v881 = vpack.c.b16 %v859, %v858
    %v882 = vpack.c.b16 %v861, %v860
    %v883 = vpack.c.b16 %v863, %v862
    %v884 = vpack.c.b16 %v865, %v864
    %v885 = vpack.c.b16 %v867, %v866
    %v886 = vpack.c.b16 %v869, %v868
    %v887 = vpack.c.b16 %v871, %v870
    %904 = vmatprep.subr.bf16.mxu0 0
    %905 = vmatpush1.bf16.msra.mxu0 %v879
    %906 = vmatprep.subr.bf16.mxu0 0
    %907 = vmatpush1.bf16.msra.mxu0 %v878
    %908 = vmatprep.subr.bf16.mxu0 0
    %909 = vmatpush1.bf16.msra.mxu0 %v877
    %910 = vmatprep.subr.bf16.mxu0 0
    %911 = vmatpush1.bf16.msra.mxu0 %v876
    %912 = vmatprep.subr.bf16.mxu0 0
    %913 = vmatpush1.bf16.msra.mxu0 %v875
    %914 = vmatprep.subr.bf16.mxu0 0
    %915 = vmatpush1.bf16.msra.mxu0 %v874
    %916 = vmatprep.subr.bf16.mxu0 0
    %917 = vmatpush1.bf16.msra.mxu0 %v873
    %918 = vmatprep.subr.bf16.mxu0 0
    %919 = vmatpush1.bf16.msra.mxu0 %v872
    %920 = vmatprep.subr.bf16.mxu0 0
    %921 = vmatpush2.bf16.msra.mxu0 %v887
    %922 = vmatprep.subr.bf16.mxu0 0
    %923 = vmatpush2.bf16.msra.mxu0 %v886
    %924 = vmatprep.subr.bf16.mxu0 0
    %925 = vmatpush2.bf16.msra.mxu0 %v885
    %926 = vmatprep.subr.bf16.mxu0 0
    %927 = vmatpush2.bf16.msra.mxu0 %v884
    %928 = vmatprep.subr.bf16.mxu0 0
    %929 = vmatpush2.bf16.msra.mxu0 %v883
    %930 = vmatprep.subr.bf16.mxu0 0
    %931 = vmatpush2.bf16.msra.mxu0 %v882
    %932 = vmatprep.subr.bf16.mxu0 0
    %933 = vmatpush2.bf16.msra.mxu0 %v881
    %934 = vmatprep.subr.bf16.mxu0 0
    %935 = vmatpush2.bf16.msra.mxu0 %v880
    %936 = vmatprep.mubr.bf16.mxu0 %v749
    %937 = vmatmul.mubr.bf16.gmra.mxu0 %v748
    %v938 = vpop.f32.mrf.mxu0
    %v939 = vadd.f32 %v807, %v938
    %v940 = vpop.f32.mrf.mxu0
    %v941 = vpop.f32.mrf.mxu0
    %v942 = vadd.f32 %v807, %v941
    %v943 = vpop.f32.mrf.mxu0
    %944 = vmatprep.mubr.bf16.mxu0 %v751
    %945 = vmatmul.mubr.bf16.gmra.mxu0 %v750
    %v946 = vpop.f32.mrf.mxu0
    %v947 = vadd.f32 %v807, %v946
    %v948 = vpop.f32.mrf.mxu0
    %v949 = vpop.f32.mrf.mxu0
    %v950 = vadd.f32 %v807, %v949
    %v951 = vpop.f32.mrf.mxu0
    %952 = vmatprep.mubr.bf16.mxu0 %v753
    %953 = vmatmul.mubr.bf16.gmra.mxu0 %v752
    %v954 = vpop.f32.mrf.mxu0
    %v955 = vadd.f32 %v807, %v954
    %v956 = vpop.f32.mrf.mxu0
    %v957 = vpop.f32.mrf.mxu0
    %v958 = vadd.f32 %v807, %v957
    %v959 = vpop.f32.mrf.mxu0
    %960 = vmatprep.mubr.bf16.mxu0 %v755
    %961 = vmatmul.mubr.bf16.gmra.mxu0 %v754
    %v962 = vpop.f32.mrf.mxu0
    %v963 = vadd.f32 %v807, %v962
    %v964 = vpop.f32.mrf.mxu0
    %v965 = vpop.f32.mrf.mxu0
    %v966 = vadd.f32 %v807, %v965
    %v967 = vpop.f32.mrf.mxu0
    %968 = vmatprep.mubr.bf16.mxu0 %v757
    %969 = vmatmul.mubr.bf16.gmra.mxu0 %v756
    %v970 = vpop.f32.mrf.mxu0
    %v971 = vadd.f32 %v807, %v970
    %v972 = vpop.f32.mrf.mxu0
    %v973 = vpop.f32.mrf.mxu0
    %v974 = vadd.f32 %v807, %v973
    %v975 = vpop.f32.mrf.mxu0
    %976 = vmatprep.mubr.bf16.mxu0 %v759
    %977 = vmatmul.mubr.bf16.gmra.mxu0 %v758
    %v978 = vpop.f32.mrf.mxu0
    %v979 = vadd.f32 %v807, %v978
    %v980 = vpop.f32.mrf.mxu0
    %v981 = vpop.f32.mrf.mxu0
    %v982 = vadd.f32 %v807, %v981
    %v983 = vpop.f32.mrf.mxu0
    %984 = vmatprep.mubr.bf16.mxu0 %v761
    %985 = vmatmul.mubr.bf16.gmra.mxu0 %v760
    %v986 = vpop.f32.mrf.mxu0
    %v987 = vadd.f32 %v807, %v986
    %v988 = vpop.f32.mrf.mxu0
    %v989 = vpop.f32.mrf.mxu0
    %v990 = vadd.f32 %v807, %v989
    %v991 = vpop.f32.mrf.mxu0
    %992 = vmatprep.mubr.bf16.mxu0 %v763
    %993 = vmatmul.mubr.bf16.gmra.mxu0 %v762
    %v994 = vpop.f32.mrf.mxu0
    %v995 = vadd.f32 %v807, %v994
    %v996 = vpop.f32.mrf.mxu0
    %v997 = vpop.f32.mrf.mxu0
    %v998 = vadd.f32 %v807, %v997
    %v999 = vpop.f32.mrf.mxu0
    %1000 = vdwg.mxu0
    %v1001 = vmax.f32 %v939, 0.0
    %v1002 = vmax.f32 %v942, 0.0
    %v1003 = vmax.f32 %v947, 0.0
    %v1004 = vmax.f32 %v950, 0.0
    %v1005 = vmax.f32 %v955, 0.0
    %v1006 = vmax.f32 %v958, 0.0
    %v1007 = vmax.f32 %v963, 0.0
    %v1008 = vmax.f32 %v966, 0.0
    %v1009 = vmax.f32 %v971, 0.0
    %v1010 = vmax.f32 %v974, 0.0
    %v1011 = vmax.f32 %v979, 0.0
    %v1012 = vmax.f32 %v982, 0.0
    %v1013 = vmax.f32 %v987, 0.0
    %v1014 = vmax.f32 %v990, 0.0
    %v1015 = vmax.f32 %v995, 0.0
    %v1016 = vmax.f32 %v998, 0.0
    %v1017 = vpack.c.bf16 %v1002, %v1001
    %v1018 = vpack.c.bf16 %v1004, %v1003
    %v1019 = vpack.c.bf16 %v1006, %v1005
    %v1020 = vpack.c.bf16 %v1008, %v1007
    %v1021 = vpack.c.bf16 %v1010, %v1009
    %v1022 = vpack.c.bf16 %v1012, %v1011
    %v1023 = vpack.c.bf16 %v1014, %v1013
    %v1024 = vpack.c.bf16 %v1016, %v1015
    %v1025 = vld [vmem:[#allocation7 + $0x80] sm:$0xf]
    %v1026 = vld [vmem:[#allocation7 + $0x84] sm:$0xf]
    %v1027 = vld [vmem:[#allocation7 + $0x88] sm:$0xf]
    %v1028 = vld [vmem:[#allocation7 + $0x8c] sm:$0xf]
    %v1029 = vld [vmem:[#allocation7 + $0x90] sm:$0xf]
    %v1030 = vld [vmem:[#allocation7 + $0x94] sm:$0xf]
    %v1031 = vld [vmem:[#allocation7 + $0x98] sm:$0xf]
    %v1032 = vld [vmem:[#allocation7 + $0x9c] sm:$0xf]
    %v1033 = vld [vmem:[#allocation7 + $0xa0] sm:$0xf]
    %v1034 = vld [vmem:[#allocation7 + $0xa4] sm:$0xf]
    %v1035 = vld [vmem:[#allocation7 + $0xa8] sm:$0xf]
    %v1036 = vld [vmem:[#allocation7 + $0xac] sm:$0xf]
    %v1037 = vld [vmem:[#allocation7 + $0xb0] sm:$0xf]
    %v1038 = vld [vmem:[#allocation7 + $0xb4] sm:$0xf]
    %v1039 = vld [vmem:[#allocation7 + $0xb8] sm:$0xf]
    %v1040 = vld [vmem:[#allocation7 + $0xbc] sm:$0xf]
    %v1041 = vld [vmem:[#allocation7 + $0xc0] sm:$0xf]
    %v1042 = vld [vmem:[#allocation7 + $0xc4] sm:$0xf]
    %v1043 = vld [vmem:[#allocation7 + $0xc8] sm:$0xf]
    %v1044 = vld [vmem:[#allocation7 + $0xcc] sm:$0xf]
    %v1045 = vld [vmem:[#allocation7 + $0xd0] sm:$0xf]
    %v1046 = vld [vmem:[#allocation7 + $0xd4] sm:$0xf]
    %v1047 = vld [vmem:[#allocation7 + $0xd8] sm:$0xf]
    %v1048 = vld [vmem:[#allocation7 + $0xdc] sm:$0xf]
    %v1049 = vld [vmem:[#allocation7 + $0xe0] sm:$0xf]
    %v1050 = vld [vmem:[#allocation7 + $0xe4] sm:$0xf]
    %v1051 = vld [vmem:[#allocation7 + $0xe8] sm:$0xf]
    %v1052 = vld [vmem:[#allocation7 + $0xec] sm:$0xf]
    %v1053 = vld [vmem:[#allocation7 + $0xf0] sm:$0xf]
    %v1054 = vld [vmem:[#allocation7 + $0xf4] sm:$0xf]
    %v1055 = vld [vmem:[#allocation7 + $0xf8] sm:$0xf]
    %v1056 = vld [vmem:[#allocation7 + $0xfc] sm:$0xf]
    %v1073 = vunpack.c.l.b16 %v1041
    %v1074 = vunpack.c.l.b16 %v1042
    %v1075 = vunpack.c.l.b16 %v1043
    %v1076 = vunpack.c.l.b16 %v1044
    %v1077 = vunpack.c.l.b16 %v1045
    %v1078 = vunpack.c.l.b16 %v1046
    %v1079 = vunpack.c.l.b16 %v1047
    %v1080 = vunpack.c.l.b16 %v1048
    %v1081 = vunpack.c.l.b16 %v1049
    %v1082 = vunpack.c.l.b16 %v1050
    %v1083 = vunpack.c.l.b16 %v1051
    %v1084 = vunpack.c.l.b16 %v1052
    %v1085 = vunpack.c.l.b16 %v1053
    %v1086 = vunpack.c.l.b16 %v1054
    %v1087 = vunpack.c.l.b16 %v1055
    %v1088 = vunpack.c.l.b16 %v1056
    %v1089 = vpack.c.b16 %v1074, %v1073
    %v1090 = vpack.c.b16 %v1076, %v1075
    %v1091 = vpack.c.b16 %v1078, %v1077
    %v1092 = vpack.c.b16 %v1080, %v1079
    %v1093 = vpack.c.b16 %v1082, %v1081
    %v1094 = vpack.c.b16 %v1084, %v1083
    %v1095 = vpack.c.b16 %v1086, %v1085
    %v1096 = vpack.c.b16 %v1088, %v1087
    %1105 = vmatprep.subr.bf16.mxu0 0
    %1106 = vmatpush1.bf16.msra.mxu0 %v1096
    %1107 = vmatprep.subr.bf16.mxu0 0
    %1108 = vmatpush1.bf16.msra.mxu0 %v1095
    %1109 = vmatprep.subr.bf16.mxu0 0
    %1110 = vmatpush1.bf16.msra.mxu0 %v1094
    %1111 = vmatprep.subr.bf16.mxu0 0
    %1112 = vmatpush1.bf16.msra.mxu0 %v1093
    %1113 = vmatprep.subr.bf16.mxu0 0
    %1114 = vmatpush1.bf16.msra.mxu0 %v1092
    %1115 = vmatprep.subr.bf16.mxu0 0
    %1116 = vmatpush1.bf16.msra.mxu0 %v1091
    %1117 = vmatprep.subr.bf16.mxu0 0
    %1118 = vmatpush1.bf16.msra.mxu0 %v1090
    %1119 = vmatprep.subr.bf16.mxu0 0
    %1120 = vmatpush1.bf16.msra.mxu0 %v1089
    %1121 = vmatprep.subr.bf16.mxu0 0
    %1122 = vmatpush2.bf16.msra.mxu0 0
    %1123 = vmatprep.subr.bf16.mxu0 0
    %1124 = vmatpush2.bf16.msra.mxu0 0
    %1125 = vmatprep.subr.bf16.mxu0 0
    %1126 = vmatpush2.bf16.msra.mxu0 0
    %1127 = vmatprep.subr.bf16.mxu0 0
    %1128 = vmatpush2.bf16.msra.mxu0 0
    %1129 = vmatprep.subr.bf16.mxu0 0
    %1130 = vmatpush2.bf16.msra.mxu0 0
    %1131 = vmatprep.subr.bf16.mxu0 0
    %1132 = vmatpush2.bf16.msra.mxu0 0
    %1133 = vmatprep.subr.bf16.mxu0 0
    %1134 = vmatpush2.bf16.msra.mxu0 0
    %1135 = vmatprep.subr.bf16.mxu0 0
    %1136 = vmatpush2.bf16.msra.mxu0 0
    %1137 = vmatprep.mubr.bf16.mxu0 0
    %1138 = vmatmul.mubr.bf16.gmra.mxu0 %v764
    %v1139 = vpop.f32.mrf.mxu0
    %v1140 = vadd.f32 0.0, %v1139
    %v1141 = vpop.f32.mrf.mxu0
    %v1142 = vpop.f32.mrf.mxu0
    %v1143 = vadd.f32 0.0, %v1142
    %v1144 = vpop.f32.mrf.mxu0
    %1145 = vmatprep.mubr.bf16.mxu0 0
    %1146 = vmatmul.mubr.bf16.gmra.mxu0 %v765
    %v1147 = vpop.f32.mrf.mxu0
    %v1148 = vadd.f32 0.0, %v1147
    %v1149 = vpop.f32.mrf.mxu0
    %v1150 = vpop.f32.mrf.mxu0
    %v1151 = vadd.f32 0.0, %v1150
    %v1152 = vpop.f32.mrf.mxu0
    %1153 = vmatprep.mubr.bf16.mxu0 0
    %1154 = vmatmul.mubr.bf16.gmra.mxu0 %v766
    %v1155 = vpop.f32.mrf.mxu0
    %v1156 = vadd.f32 0.0, %v1155
    %v1157 = vpop.f32.mrf.mxu0
    %v1158 = vpop.f32.mrf.mxu0
    %v1159 = vadd.f32 0.0, %v1158
    %v1160 = vpop.f32.mrf.mxu0
    %1161 = vmatprep.mubr.bf16.mxu0 0
    %1162 = vmatmul.mubr.bf16.gmra.mxu0 %v767
    %v1163 = vpop.f32.mrf.mxu0
    %v1164 = vadd.f32 0.0, %v1163
    %v1165 = vpop.f32.mrf.mxu0
    %v1166 = vpop.f32.mrf.mxu0
    %v1167 = vadd.f32 0.0, %v1166
    %v1168 = vpop.f32.mrf.mxu0
    %1169 = vmatprep.mubr.bf16.mxu0 0
    %1170 = vmatmul.mubr.bf16.gmra.mxu0 %v768
    %v1171 = vpop.f32.mrf.mxu0
    %v1172 = vadd.f32 0.0, %v1171
    %v1173 = vpop.f32.mrf.mxu0
    %v1174 = vpop.f32.mrf.mxu0
    %v1175 = vadd.f32 0.0, %v1174
    %v1176 = vpop.f32.mrf.mxu0
    %1177 = vmatprep.mubr.bf16.mxu0 0
    %1178 = vmatmul.mubr.bf16.gmra.mxu0 %v769
    %v1179 = vpop.f32.mrf.mxu0
    %v1180 = vadd.f32 0.0, %v1179
    %v1181 = vpop.f32.mrf.mxu0
    %v1182 = vpop.f32.mrf.mxu0
    %v1183 = vadd.f32 0.0, %v1182
    %v1184 = vpop.f32.mrf.mxu0
    %1185 = vmatprep.mubr.bf16.mxu0 0
    %1186 = vmatmul.mubr.bf16.gmra.mxu0 %v770
    %v1187 = vpop.f32.mrf.mxu0
    %v1188 = vadd.f32 0.0, %v1187
    %v1189 = vpop.f32.mrf.mxu0
    %v1190 = vpop.f32.mrf.mxu0
    %v1191 = vadd.f32 0.0, %v1190
    %v1192 = vpop.f32.mrf.mxu0
    %1193 = vmatprep.mubr.bf16.mxu0 0
    %1194 = vmatmul.mubr.bf16.gmra.mxu0 %v771
    %v1195 = vpop.f32.mrf.mxu0
    %v1196 = vadd.f32 0.0, %v1195
    %v1197 = vpop.f32.mrf.mxu0
    %v1198 = vpop.f32.mrf.mxu0
    %v1199 = vadd.f32 0.0, %v1198
    %v1200 = vpop.f32.mrf.mxu0
    %1201 = vdwg.mxu0
    %v1218 = vunpack.c.l.b16 %v1025
    %v1219 = vunpack.c.l.b16 %v1026
    %v1220 = vunpack.c.l.b16 %v1027
    %v1221 = vunpack.c.l.b16 %v1028
    %v1222 = vunpack.c.l.b16 %v1029
    %v1223 = vunpack.c.l.b16 %v1030
    %v1224 = vunpack.c.l.b16 %v1031
    %v1225 = vunpack.c.l.b16 %v1032
    %v1226 = vunpack.c.l.b16 %v1033
    %v1227 = vunpack.c.l.b16 %v1034
    %v1228 = vunpack.c.l.b16 %v1035
    %v1229 = vunpack.c.l.b16 %v1036
    %v1230 = vunpack.c.l.b16 %v1037
    %v1231 = vunpack.c.l.b16 %v1038
    %v1232 = vunpack.c.l.b16 %v1039
    %v1233 = vunpack.c.l.b16 %v1040
    %v1234 = vpack.c.b16 %v1219, %v1218
    %v1235 = vpack.c.b16 %v1221, %v1220
    %v1236 = vpack.c.b16 %v1223, %v1222
    %v1237 = vpack.c.b16 %v1225, %v1224
    %v1238 = vpack.c.b16 %v1227, %v1226
    %v1239 = vpack.c.b16 %v1229, %v1228
    %v1240 = vpack.c.b16 %v1231, %v1230
    %v1241 = vpack.c.b16 %v1233, %v1232
    %1250 = vmatprep.subr.bf16.mxu0 0
    %1251 = vmatpush1.bf16.msra.mxu0 %v1241
    %1252 = vmatprep.subr.bf16.mxu0 0
    %1253 = vmatpush1.bf16.msra.mxu0 %v1240
    %1254 = vmatprep.subr.bf16.mxu0 0
    %1255 = vmatpush1.bf16.msra.mxu0 %v1239
    %1256 = vmatprep.subr.bf16.mxu0 0
    %1257 = vmatpush1.bf16.msra.mxu0 %v1238
    %1258 = vmatprep.subr.bf16.mxu0 0
    %1259 = vmatpush1.bf16.msra.mxu0 %v1237
    %1260 = vmatprep.subr.bf16.mxu0 0
    %1261 = vmatpush1.bf16.msra.mxu0 %v1236
    %1262 = vmatprep.subr.bf16.mxu0 0
    %1263 = vmatpush1.bf16.msra.mxu0 %v1235
    %1264 = vmatprep.subr.bf16.mxu0 0
    %1265 = vmatpush1.bf16.msra.mxu0 %v1234
    %1266 = vmatprep.subr.bf16.mxu0 0
    %1267 = vmatpush2.bf16.msra.mxu0 0
    %1268 = vmatprep.subr.bf16.mxu0 0
    %1269 = vmatpush2.bf16.msra.mxu0 0
    %1270 = vmatprep.subr.bf16.mxu0 0
    %1271 = vmatpush2.bf16.msra.mxu0 0
    %1272 = vmatprep.subr.bf16.mxu0 0
    %1273 = vmatpush2.bf16.msra.mxu0 0
    %1274 = vmatprep.subr.bf16.mxu0 0
    %1275 = vmatpush2.bf16.msra.mxu0 0
    %1276 = vmatprep.subr.bf16.mxu0 0
    %1277 = vmatpush2.bf16.msra.mxu0 0
    %1278 = vmatprep.subr.bf16.mxu0 0
    %1279 = vmatpush2.bf16.msra.mxu0 0
    %1280 = vmatprep.subr.bf16.mxu0 0
    %1281 = vmatpush2.bf16.msra.mxu0 0
    %1282 = vmatprep.mubr.bf16.mxu0 0
    %1283 = vmatmul.mubr.bf16.gmra.mxu0 %v1017
    %v1284 = vpop.f32.mrf.mxu0
    %v1285 = vadd.f32 %v1140, %v1284
    %v1286 = vpop.f32.mrf.mxu0
    %v1287 = vpop.f32.mrf.mxu0
    %v1288 = vadd.f32 %v1143, %v1287
    %v1289 = vpop.f32.mrf.mxu0
    %1290 = vmatprep.mubr.bf16.mxu0 0
    %1291 = vmatmul.mubr.bf16.gmra.mxu0 %v1018
    %v1292 = vpop.f32.mrf.mxu0
    %v1293 = vadd.f32 %v1148, %v1292
    %v1294 = vpop.f32.mrf.mxu0
    %v1295 = vpop.f32.mrf.mxu0
    %v1296 = vadd.f32 %v1151, %v1295
    %v1297 = vpop.f32.mrf.mxu0
    %1298 = vmatprep.mubr.bf16.mxu0 0
    %1299 = vmatmul.mubr.bf16.gmra.mxu0 %v1019
    %v1300 = vpop.f32.mrf.mxu0
    %v1301 = vadd.f32 %v1156, %v1300
    %v1302 = vpop.f32.mrf.mxu0
    %v1303 = vpop.f32.mrf.mxu0
    %v1304 = vadd.f32 %v1159, %v1303
    %v1305 = vpop.f32.mrf.mxu0
    %1306 = vmatprep.mubr.bf16.mxu0 0
    %1307 = vmatmul.mubr.bf16.gmra.mxu0 %v1020
    %v1308 = vpop.f32.mrf.mxu0
    %v1309 = vadd.f32 %v1164, %v1308
    %v1310 = vpop.f32.mrf.mxu0
    %v1311 = vpop.f32.mrf.mxu0
    %v1312 = vadd.f32 %v1167, %v1311
    %v1313 = vpop.f32.mrf.mxu0
    %1314 = vmatprep.mubr.bf16.mxu0 0
    %1315 = vmatmul.mubr.bf16.gmra.mxu0 %v1021
    %v1316 = vpop.f32.mrf.mxu0
    %v1317 = vadd.f32 %v1172, %v1316
    %v1318 = vpop.f32.mrf.mxu0
    %v1319 = vpop.f32.mrf.mxu0
    %v1320 = vadd.f32 %v1175, %v1319
    %v1321 = vpop.f32.mrf.mxu0
    %1322 = vmatprep.mubr.bf16.mxu0 0
    %1323 = vmatmul.mubr.bf16.gmra.mxu0 %v1022
    %v1324 = vpop.f32.mrf.mxu0
    %v1325 = vadd.f32 %v1180, %v1324
    %v1326 = vpop.f32.mrf.mxu0
    %v1327 = vpop.f32.mrf.mxu0
    %v1328 = vadd.f32 %v1183, %v1327
    %v1329 = vpop.f32.mrf.mxu0
    %1330 = vmatprep.mubr.bf16.mxu0 0
    %1331 = vmatmul.mubr.bf16.gmra.mxu0 %v1023
    %v1332 = vpop.f32.mrf.mxu0
    %v1333 = vadd.f32 %v1188, %v1332
    %v1334 = vpop.f32.mrf.mxu0
    %v1335 = vpop.f32.mrf.mxu0
    %v1336 = vadd.f32 %v1191, %v1335
    %v1337 = vpop.f32.mrf.mxu0
    %1338 = vmatprep.mubr.bf16.mxu0 0
    %1339 = vmatmul.mubr.bf16.gmra.mxu0 %v1024
    %v1340 = vpop.f32.mrf.mxu0
    %v1341 = vadd.f32 %v1196, %v1340
    %v1342 = vpop.f32.mrf.mxu0
    %v1343 = vpop.f32.mrf.mxu0
    %v1344 = vadd.f32 %v1199, %v1343
    %v1345 = vpop.f32.mrf.mxu0
    %1346 = vdwg.mxu0
    %v1347 = vlaneseq
    %v1348 = vshrl.u32 %v1347, 7
    %v1349 = vsub.s32 2, %v1348
    %v1350 = vrot.slane %v139, %v1349
    %v1351 = vadd.f32 %v1285, %v1350
    %v1352 = vadd.f32 %v1288, %v1350
    %v1353 = vadd.f32 %v1293, %v1350
    %v1354 = vadd.f32 %v1296, %v1350
    %v1355 = vadd.f32 %v1301, %v1350
    %v1356 = vadd.f32 %v1304, %v1350
    %v1357 = vadd.f32 %v1309, %v1350
    %v1358 = vadd.f32 %v1312, %v1350
    %v1359 = vadd.f32 %v1317, %v1350
    %v1360 = vadd.f32 %v1320, %v1350
    %v1361 = vadd.f32 %v1325, %v1350
    %v1362 = vadd.f32 %v1328, %v1350
    %v1363 = vadd.f32 %v1333, %v1350
    %v1364 = vadd.f32 %v1336, %v1350
    %v1365 = vadd.f32 %v1341, %v1350
    %v1366 = vadd.f32 %v1344, %v1350
    %v1367 = vmax.f32 %v1351, 0.0
    %v1368 = vmax.f32 %v1352, 0.0
    %v1369 = vmax.f32 %v1353, 0.0
    %v1370 = vmax.f32 %v1354, 0.0
    %v1371 = vmax.f32 %v1355, 0.0
    %v1372 = vmax.f32 %v1356, 0.0
    %v1373 = vmax.f32 %v1357, 0.0
    %v1374 = vmax.f32 %v1358, 0.0
    %v1375 = vmax.f32 %v1359, 0.0
    %v1376 = vmax.f32 %v1360, 0.0
    %v1377 = vmax.f32 %v1361, 0.0
    %v1378 = vmax.f32 %v1362, 0.0
    %v1379 = vmax.f32 %v1363, 0.0
    %v1380 = vmax.f32 %v1364, 0.0
    %v1381 = vmax.f32 %v1365, 0.0
    %v1382 = vmax.f32 %v1366, 0.0
    %v1383 = vpack.c.bf16 %v1368, %v1367
    %v1384 = vpack.c.bf16 %v1370, %v1369
    %v1385 = vpack.c.bf16 %v1372, %v1371
    %v1386 = vpack.c.bf16 %v1374, %v1373
    %v1387 = vpack.c.bf16 %v1376, %v1375
    %v1388 = vpack.c.bf16 %v1378, %v1377
    %v1389 = vpack.c.bf16 %v1380, %v1379
    %v1390 = vpack.c.bf16 %v1382, %v1381
    %v1391 = vld [vmem:[#allocation7 + $0x100] sm:$0xf]
    %v1392 = vld [vmem:[#allocation7 + $0x104] sm:$0xf]
    %v1393 = vld [vmem:[#allocation7 + $0x108] sm:$0xf]
    %v1394 = vld [vmem:[#allocation7 + $0x10c] sm:$0xf]
    %v1395 = vld [vmem:[#allocation7 + $0x110] sm:$0xf]
    %v1396 = vld [vmem:[#allocation7 + $0x114] sm:$0xf]
    %v1397 = vld [vmem:[#allocation7 + $0x118] sm:$0xf]
    %v1398 = vld [vmem:[#allocation7 + $0x11c] sm:$0xf]
    %v1399 = vld [vmem:[#allocation7 + $0x120] sm:$0xf]
    %v1400 = vld [vmem:[#allocation7 + $0x124] sm:$0xf]
    %v1401 = vld [vmem:[#allocation7 + $0x128] sm:$0xf]
    %v1402 = vld [vmem:[#allocation7 + $0x12c] sm:$0xf]
    %v1403 = vld [vmem:[#allocation7 + $0x130] sm:$0xf]
    %v1404 = vld [vmem:[#allocation7 + $0x134] sm:$0xf]
    %v1405 = vld [vmem:[#allocation7 + $0x138] sm:$0xf]
    %v1406 = vld [vmem:[#allocation7 + $0x13c] sm:$0xf]
    %v1407 = vlaneseq
    %v1408 = vshrl.u32 %v1407, 7
    %v1409 = vsub.s32 3, %v1408
    %v1410 = vrot.slane %v139, %v1409
    %v1427 = vunpack.c.l.b16 %v1391
    %v1428 = vunpack.c.l.b16 %v1392
    %v1429 = vunpack.c.l.b16 %v1393
    %v1430 = vunpack.c.l.b16 %v1394
    %v1431 = vunpack.c.l.b16 %v1395
    %v1432 = vunpack.c.l.b16 %v1396
    %v1433 = vunpack.c.l.b16 %v1397
    %v1434 = vunpack.c.l.b16 %v1398
    %v1435 = vunpack.c.l.b16 %v1399
    %v1436 = vunpack.c.l.b16 %v1400
    %v1437 = vunpack.c.l.b16 %v1401
    %v1438 = vunpack.c.l.b16 %v1402
    %v1439 = vunpack.c.l.b16 %v1403
    %v1440 = vunpack.c.l.b16 %v1404
    %v1441 = vunpack.c.l.b16 %v1405
    %v1442 = vunpack.c.l.b16 %v1406
    %v1443 = vpack.c.b16 %v1428, %v1427
    %v1444 = vpack.c.b16 %v1430, %v1429
    %v1445 = vpack.c.b16 %v1432, %v1431
    %v1446 = vpack.c.b16 %v1434, %v1433
    %v1447 = vpack.c.b16 %v1436, %v1435
    %v1448 = vpack.c.b16 %v1438, %v1437
    %v1449 = vpack.c.b16 %v1440, %v1439
    %v1450 = vpack.c.b16 %v1442, %v1441
    %1459 = vmatprep.subr.bf16.mxu0 0
    %1460 = vmatpush1.bf16.msra.mxu0 %v1450
    %1461 = vmatprep.subr.bf16.mxu0 0
    %1462 = vmatpush1.bf16.msra.mxu0 %v1449
    %1463 = vmatprep.subr.bf16.mxu0 0
    %1464 = vmatpush1.bf16.msra.mxu0 %v1448
    %1465 = vmatprep.subr.bf16.mxu0 0
    %1466 = vmatpush1.bf16.msra.mxu0 %v1447
    %1467 = vmatprep.subr.bf16.mxu0 0
    %1468 = vmatpush1.bf16.msra.mxu0 %v1446
    %1469 = vmatprep.subr.bf16.mxu0 0
    %1470 = vmatpush1.bf16.msra.mxu0 %v1445
    %1471 = vmatprep.subr.bf16.mxu0 0
    %1472 = vmatpush1.bf16.msra.mxu0 %v1444
    %1473 = vmatprep.subr.bf16.mxu0 0
    %1474 = vmatpush1.bf16.msra.mxu0 %v1443
    %1475 = vmatprep.subr.bf16.mxu0 0
    %1476 = vmatpush2.bf16.msra.mxu0 0
    %1477 = vmatprep.subr.bf16.mxu0 0
    %1478 = vmatpush2.bf16.msra.mxu0 0
    %1479 = vmatprep.subr.bf16.mxu0 0
    %1480 = vmatpush2.bf16.msra.mxu0 0
    %1481 = vmatprep.subr.bf16.mxu0 0
    %1482 = vmatpush2.bf16.msra.mxu0 0
    %1483 = vmatprep.subr.bf16.mxu0 0
    %1484 = vmatpush2.bf16.msra.mxu0 0
    %1485 = vmatprep.subr.bf16.mxu0 0
    %1486 = vmatpush2.bf16.msra.mxu0 0
    %1487 = vmatprep.subr.bf16.mxu0 0
    %1488 = vmatpush2.bf16.msra.mxu0 0
    %1489 = vmatprep.subr.bf16.mxu0 0
    %1490 = vmatpush2.bf16.msra.mxu0 0
    %1491 = vmatprep.mubr.bf16.mxu0 0
    %1492 = vmatmul.mubr.bf16.gmra.mxu0 %v1383
    %v1493 = vpop.f32.mrf.mxu0
    %v1494 = vadd.f32 %v1410, %v1493
    %v1495 = vpop.f32.mrf.mxu0
    %v1496 = vpop.f32.mrf.mxu0
    %v1497 = vadd.f32 %v1410, %v1496
    %v1498 = vpop.f32.mrf.mxu0
    %1499 = vmatprep.mubr.bf16.mxu0 0
    %1500 = vmatmul.mubr.bf16.gmra.mxu0 %v1384
    %v1501 = vpop.f32.mrf.mxu0
    %v1502 = vadd.f32 %v1410, %v1501
    %v1503 = vpop.f32.mrf.mxu0
    %v1504 = vpop.f32.mrf.mxu0
    %v1505 = vadd.f32 %v1410, %v1504
    %v1506 = vpop.f32.mrf.mxu0
    %1507 = vmatprep.mubr.bf16.mxu0 0
    %1508 = vmatmul.mubr.bf16.gmra.mxu0 %v1385
    %v1509 = vpop.f32.mrf.mxu0
    %v1510 = vadd.f32 %v1410, %v1509
    %v1511 = vpop.f32.mrf.mxu0
    %v1512 = vpop.f32.mrf.mxu0
    %v1513 = vadd.f32 %v1410, %v1512
    %v1514 = vpop.f32.mrf.mxu0
    %1515 = vmatprep.mubr.bf16.mxu0 0
    %1516 = vmatmul.mubr.bf16.gmra.mxu0 %v1386
    %v1517 = vpop.f32.mrf.mxu0
    %v1518 = vadd.f32 %v1410, %v1517
    %v1519 = vpop.f32.mrf.mxu0
    %v1520 = vpop.f32.mrf.mxu0
    %v1521 = vadd.f32 %v1410, %v1520
    %v1522 = vpop.f32.mrf.mxu0
    %1523 = vmatprep.mubr.bf16.mxu0 0
    %1524 = vmatmul.mubr.bf16.gmra.mxu0 %v1387
    %v1525 = vpop.f32.mrf.mxu0
    %v1526 = vadd.f32 %v1410, %v1525
    %v1527 = vpop.f32.mrf.mxu0
    %v1528 = vpop.f32.mrf.mxu0
    %v1529 = vadd.f32 %v1410, %v1528
    %v1530 = vpop.f32.mrf.mxu0
    %1531 = vmatprep.mubr.bf16.mxu0 0
    %1532 = vmatmul.mubr.bf16.gmra.mxu0 %v1388
    %v1533 = vpop.f32.mrf.mxu0
    %v1534 = vadd.f32 %v1410, %v1533
    %v1535 = vpop.f32.mrf.mxu0
    %v1536 = vpop.f32.mrf.mxu0
    %v1537 = vadd.f32 %v1410, %v1536
    %v1538 = vpop.f32.mrf.mxu0
    %1539 = vmatprep.mubr.bf16.mxu0 0
    %1540 = vmatmul.mubr.bf16.gmra.mxu0 %v1389
    %v1541 = vpop.f32.mrf.mxu0
    %v1542 = vadd.f32 %v1410, %v1541
    %v1543 = vpop.f32.mrf.mxu0
    %v1544 = vpop.f32.mrf.mxu0
    %v1545 = vadd.f32 %v1410, %v1544
    %v1546 = vpop.f32.mrf.mxu0
    %1547 = vmatprep.mubr.bf16.mxu0 0
    %1548 = vmatmul.mubr.bf16.gmra.mxu0 %v1390
    %v1549 = vpop.f32.mrf.mxu0
    %v1550 = vadd.f32 %v1410, %v1549
    %v1551 = vpop.f32.mrf.mxu0
    %v1552 = vpop.f32.mrf.mxu0
    %v1553 = vadd.f32 %v1410, %v1552
    %v1554 = vpop.f32.mrf.mxu0
    %1555 = vdwg.mxu0
    %v1556 = vmax.f32 %v1494, 0.0
    %v1557 = vmax.f32 %v1497, 0.0
    %v1558 = vmax.f32 %v1502, 0.0
    %v1559 = vmax.f32 %v1505, 0.0
    %v1560 = vmax.f32 %v1510, 0.0
    %v1561 = vmax.f32 %v1513, 0.0
    %v1562 = vmax.f32 %v1518, 0.0
    %v1563 = vmax.f32 %v1521, 0.0
    %v1564 = vmax.f32 %v1526, 0.0
    %v1565 = vmax.f32 %v1529, 0.0
    %v1566 = vmax.f32 %v1534, 0.0
    %v1567 = vmax.f32 %v1537, 0.0
    %v1568 = vmax.f32 %v1542, 0.0
    %v1569 = vmax.f32 %v1545, 0.0
    %v1570 = vmax.f32 %v1550, 0.0
    %v1571 = vmax.f32 %v1553, 0.0
    %v1572 = vlaneseq
    %v1573 = vshrl.u32 %v1572, 7
    %v1574 = vsub.s32 4, %v1573
    %v1575 = vrot.slane %v139, %v1574
    %v1576 = vmul.f32 %v1556, %v1575
    %v1577 = vmul.f32 %v1557, %v1575
    %v1578 = vmul.f32 %v1558, %v1575
    %v1579 = vmul.f32 %v1559, %v1575
    %v1580 = vmul.f32 %v1560, %v1575
    %v1581 = vmul.f32 %v1561, %v1575
    %v1582 = vmul.f32 %v1562, %v1575
    %v1583 = vmul.f32 %v1563, %v1575
    %v1584 = vmul.f32 %v1564, %v1575
    %v1585 = vmul.f32 %v1565, %v1575
    %v1586 = vmul.f32 %v1566, %v1575
    %v1587 = vmul.f32 %v1567, %v1575
    %v1588 = vmul.f32 %v1568, %v1575
    %v1589 = vmul.f32 %v1569, %v1575
    %v1590 = vmul.f32 %v1570, %v1575
    %v1591 = vmul.f32 %v1571, %v1575
    %1592 = vadd.xlane.f32.xlu0 %v1576
    %v1593 = vpop.xlane.xlu0 %1592
    %1594 = vadd.xlane.f32.xlu0 %v1577
    %v1595 = vpop.xlane.xlu0 %1594
    %1596 = vadd.xlane.f32.xlu0 %v1578
    %v1597 = vpop.xlane.xlu0 %1596
    %1598 = vadd.xlane.f32.xlu0 %v1579
    %v1599 = vpop.xlane.xlu0 %1598
    %1600 = vadd.xlane.f32.xlu0 %v1580
    %v1601 = vpop.xlane.xlu0 %1600
    %1602 = vadd.xlane.f32.xlu0 %v1581
    %v1603 = vpop.xlane.xlu0 %1602
    %1604 = vadd.xlane.f32.xlu0 %v1582
    %v1605 = vpop.xlane.xlu0 %1604
    %1606 = vadd.xlane.f32.xlu0 %v1583
    %v1607 = vpop.xlane.xlu0 %1606
    %1608 = vadd.xlane.f32.xlu0 %v1584
    %v1609 = vpop.xlane.xlu0 %1608
    %1610 = vadd.xlane.f32.xlu0 %v1585
    %v1611 = vpop.xlane.xlu0 %1610
    %1612 = vadd.xlane.f32.xlu0 %v1586
    %v1613 = vpop.xlane.xlu0 %1612
    %1614 = vadd.xlane.f32.xlu0 %v1587
    %v1615 = vpop.xlane.xlu0 %1614
    %1616 = vadd.xlane.f32.xlu0 %v1588
    %v1617 = vpop.xlane.xlu0 %1616
    %1618 = vadd.xlane.f32.xlu0 %v1589
    %v1619 = vpop.xlane.xlu0 %1618
    %1620 = vadd.xlane.f32.xlu0 %v1590
    %v1621 = vpop.xlane.xlu0 %1620
    %1622 = vadd.xlane.f32.xlu0 %v1591
    %v1623 = vpop.xlane.xlu0 %1622
    %v1624 = vlaneseq
    %v1625 = vshrl.u32 %v1624, 7
    %v1626 = vsub.s32 5, %v1625
    %v1627 = vrot.slane %v139, %v1626
    %v1628 = vadd.f32 %v1593, %v1627
    %v1629 = vadd.f32 %v1595, %v1627
    %v1630 = vadd.f32 %v1597, %v1627
    %v1631 = vadd.f32 %v1599, %v1627
    %v1632 = vadd.f32 %v1601, %v1627
    %v1633 = vadd.f32 %v1603, %v1627
    %v1634 = vadd.f32 %v1605, %v1627
    %v1635 = vadd.f32 %v1607, %v1627
    %v1636 = vadd.f32 %v1609, %v1627
    %v1637 = vadd.f32 %v1611, %v1627
    %v1638 = vadd.f32 %v1613, %v1627
    %v1639 = vadd.f32 %v1615, %v1627
    %v1640 = vadd.f32 %v1617, %v1627
    %v1641 = vadd.f32 %v1619, %v1627
    %v1642 = vadd.f32 %v1621, %v1627
    %v1643 = vadd.f32 %v1623, %v1627
    %1645 = vset.pattern.permute.xlu0 0
    %1646 = vperm.xlu0 %1645, %v1628
    %v1647 = vpop.permute.xlu0 %1646
    %1650 = vset.pattern.permute.xlu0 0
    %1651 = vperm.xlu0 %1650, %v1629
    %v1652 = vpop.permute.xlu0 %1651
    %1655 = vset.pattern.permute.xlu0 0
    %1656 = vperm.xlu0 %1655, %v1630
    %v1657 = vpop.permute.xlu0 %1656
    %1660 = vset.pattern.permute.xlu0 0
    %1661 = vperm.xlu0 %1660, %v1631
    %v1662 = vpop.permute.xlu0 %1661
    %1665 = vset.pattern.permute.xlu0 0
    %1666 = vperm.xlu0 %1665, %v1632
    %v1667 = vpop.permute.xlu0 %1666
    %1670 = vset.pattern.permute.xlu0 0
    %1671 = vperm.xlu0 %1670, %v1633
    %v1672 = vpop.permute.xlu0 %1671
    %1675 = vset.pattern.permute.xlu0 0
    %1676 = vperm.xlu0 %1675, %v1634
    %v1677 = vpop.permute.xlu0 %1676
    %1680 = vset.pattern.permute.xlu0 0
    %1681 = vperm.xlu0 %1680, %v1635
    %v1682 = vpop.permute.xlu0 %1681
    %1685 = vset.pattern.permute.xlu0 0
    %1686 = vperm.xlu0 %1685, %v1636
    %v1687 = vpop.permute.xlu0 %1686
    %1690 = vset.pattern.permute.xlu0 0
    %1691 = vperm.xlu0 %1690, %v1637
    %v1692 = vpop.permute.xlu0 %1691
    %1695 = vset.pattern.permute.xlu0 0
    %1696 = vperm.xlu0 %1695, %v1638
    %v1697 = vpop.permute.xlu0 %1696
    %1700 = vset.pattern.permute.xlu0 0
    %1701 = vperm.xlu0 %1700, %v1639
    %v1702 = vpop.permute.xlu0 %1701
    %1705 = vset.pattern.permute.xlu0 0
    %1706 = vperm.xlu0 %1705, %v1640
    %v1707 = vpop.permute.xlu0 %1706
    %1710 = vset.pattern.permute.xlu0 0
    %1711 = vperm.xlu0 %1710, %v1641
    %v1712 = vpop.permute.xlu0 %1711
    %1715 = vset.pattern.permute.xlu0 0
    %1716 = vperm.xlu0 %1715, %v1642
    %v1717 = vpop.permute.xlu0 %1716
    %1720 = vset.pattern.permute.xlu0 0
    %1721 = vperm.xlu0 %1720, %v1643
    %v1722 = vpop.permute.xlu0 %1721
    %1724 = vst [vmem:[#allocation8] sm:$0xff] %v1647
    %1725 = vst [vmem:[#allocation8 + $0x8] sm:$0xff] %v1652
    %1726 = vst [vmem:[#allocation8 + $0x10] sm:$0xff] %v1657
    %1727 = vst [vmem:[#allocation8 + $0x18] sm:$0xff] %v1662
    %1728 = vst [vmem:[#allocation8 + $0x20] sm:$0xff] %v1667
    %1729 = vst [vmem:[#allocation8 + $0x28] sm:$0xff] %v1672
    %1730 = vst [vmem:[#allocation8 + $0x30] sm:$0xff] %v1677
    %1731 = vst [vmem:[#allocation8 + $0x38] sm:$0xff] %v1682
    %1732 = vst [vmem:[#allocation8 + $0x40] sm:$0xff] %v1687
    %1733 = vst [vmem:[#allocation8 + $0x48] sm:$0xff] %v1692
    %1734 = vst [vmem:[#allocation8 + $0x50] sm:$0xff] %v1697
    %1735 = vst [vmem:[#allocation8 + $0x58] sm:$0xff] %v1702
    %1736 = vst [vmem:[#allocation8 + $0x60] sm:$0xff] %v1707
    %1737 = vst [vmem:[#allocation8 + $0x68] sm:$0xff] %v1712
    %1738 = vst [vmem:[#allocation8 + $0x70] sm:$0xff] %v1717
    %1739 = vst [vmem:[#allocation8 + $0x78] sm:$0xff] %v1722
    // Predicated region
    $region26: #{tpu_custom_call.1} parent=1 // pred_check
      _
    $region27: #{tpu_custom_call.1} parent=1 // pred_check_branch
      %1741 = sbr.rel (0) target = $region29
    $region28: #{tpu_custom_call.1} parent=1 // pred_region
      %s1743 = ssub.s32 2048, 2048
      %1744 = vsyncadd [#allocation4], %s1743
      %s1745 = sshll.u32 [#allocation8], 4
      %s1746 = int_to_ptr.vmem [resolvable:$true] %s1745
      %1751 = dma.vmem_to_hbm [thread:$0]  %s1746, 2048, %s3, [#allocation4], 128, 128, 8
    $region29: #{tpu_custom_call.1} parent=1 // pred_fallthru
      _
    // Predicated region
    $region30: #{tpu_custom_call.1} parent=1 // pred_check
      _
    $region31: #{tpu_custom_call.1} parent=1 // pred_check_branch
      %1753 = sbr.rel (0) target = $region33
    $region32: #{tpu_custom_call.1} parent=1 // pred_region
      %1754 = dma.done [#allocation4], 2048
    $region33: #{tpu_custom_call.1} parent=1 // pred_fallthru
      _
    %1755 = vsyncpa [#allocation3], 1
    %1756 = vsyncpa [#allocation6], 1
    %1757 = vsyncpa [#allocation4], 1

</llo_original>
